<compile_context>
chip_gen: v5e
topology: v5e:2x2
jax: 0.10.0
libtpu: 0.0.40
codegen_flags: <defaults>
</compile_context>

<pallas_src>
import jax
import jax.numpy as jnp
from jax import lax
from jax.experimental import pallas as pl
from jax.experimental.pallas import tpu as pltpu


def _round_up(x, m):
    return ((x + m - 1) // m) * m


def _vmem_limit_bytes(frac=0.85):
    """~85% of physical per-core VMEM (leaves headroom for compiler scratch)."""
    cap = None
    try:
        cap = getattr(pltpu.get_tpu_info(), "vmem_capacity_bytes", None)
    except Exception:
        cap = None
    if not cap:
        cap = 64 * 1024 * 1024  # conservative fallback (v7x-sized)
    return int(cap * frac)


def _num_tensorcores():
    """2 on chips with two TensorCores behind one device (v4 / v5p / v7x)."""
    try:
        kind = jax.devices()[0].device_kind.lower()
    except Exception:
        return 1
    return 2 if any(tag in kind for tag in ("v7", "v4", "v5p")) else 1


def _const_spec(shape, index_map):
    """BlockSpec for a block whose index never changes: single-buffer it so the
    resident weights are not allocated twice in VMEM."""
    try:
        return pl.BlockSpec(shape, index_map, pipeline_mode=pl.Buffered(1))
    except Exception:  # older API without pipeline_mode: fall back to default
        return pl.BlockSpec(shape, index_map)


# ---------------------------------------------------------------------------
# Kernel 1: GRU recurrence. Grid = (batch_tiles, time_blocks).
#   x_ref   : (T, bt, Dc)   bf16  time-major input block
#   wih_ref : (Dc, 3Hp)     bf16  fused input-gate weights  [r | z | n]
#   whh_ref : (Hp, 3Hp)     bf16  fused hidden-gate weights [r | z | n]
#   bx_ref  : (1, 3Hp)      f32   [b_ir+b_hr | b_iz+b_hz | b_in]
#   bhn_ref : (1, Hp)       f32   b_hn (stays inside the reset product)
#   out_ref : (bt, T, Hp)   bf16  hidden states, written BATCH-major
#   h_ref   : (bt, Hp)      f32   scratch: hidden state carried across time
#   gx_ref  : (T, bt, 3Hp)  f32   scratch: hoisted input-gate activations
# ---------------------------------------------------------------------------
def gru_block_kernel(x_ref, wih_ref, whh_ref, bx_ref, bhn_ref,
                     out_ref, h_ref, gx_ref):
    T, bt, Dc = x_ref.shape
    Hp = h_ref.shape[-1]

    # Reset the carried hidden state at the first time-block of each batch tile.
    @pl.when(pl.program_id(1) == 0)
    def _():
        h_ref[...] = jnp.zeros_like(h_ref)

    # Hoisted input-side gates: one GEMM (M = T*bt) for the whole time block.
    x_blk = x_ref[...].reshape(T * bt, Dc)
    gx_ref[...] = (
        jnp.dot(x_blk, wih_ref[...], preferred_element_type=jnp.float32)
        + bx_ref[...]
    ).reshape(T, bt, 3 * Hp)

    whh = whh_ref[...]
    bhn = bhn_ref[...]

    # TODO(synk): if a bundle dump shows the per-step matmul is W_hh
    # weight-stream bound (small M) and Hp fits the MXU, stage W_hh with
    # pltpu.matmul_push_rhs / matmul_acc_lhs / matmul_pop across timesteps.
    def step(t, h):
        gx_t = gx_ref[t]                                            # (bt, 3Hp)
        gh = jnp.dot(h.astype(whh.dtype), whh,
                     preferred_element_type=jnp.float32)            # (bt, 3Hp)
        r = jax.nn.sigmoid(gx_t[:, :Hp] + gh[:, :Hp])
        z = jax.nn.sigmoid(gx_t[:, Hp:2 * Hp] + gh[:, Hp:2 * Hp])
        n = jnp.tanh(gx_t[:, 2 * Hp:] + r * (gh[:, 2 * Hp:] + bhn))
        h = (1.0 - z) * n + z * h
        # Batch-major store (one timestep row per batch element).  Masked vst,
        # off the serial dependence chain; removes the XLA transpose pass.
        out_ref[:, pl.ds(t, 1), :] = h.astype(out_ref.dtype)[:, None, :]
        return h

    # Bounded unroll: keeps live ranges in the vreg file at production sizes,
    # full unroll (LLO visibility) when the per-step working set is small.
    per_step_bytes = 10 * bt * Hp * 4
    unroll = min(T, 8) if per_step_bytes <= 96 * 1024 else 2
    h_ref[...] = lax.fori_loop(0, T, step, h_ref[...], unroll=unroll)


def run_gru(x_sbd, wih, whh, bx, bhn, *, block_t, batch_tiles, vmem_limit):
    Sp, Bp, Dc = x_sbd.shape
    Hp, H3 = whh.shape
    bt = Bp // batch_tiles
    return pl.pallas_call(
        gru_block_kernel,
        out_shape=jax.ShapeDtypeStruct((Bp, Sp, Hp), jnp.bfloat16),
        grid_spec=pltpu.PrefetchScalarGridSpec(
            num_scalar_prefetch=0,
            grid=(batch_tiles, Sp // block_t),      # (parallel batch, serial time)
            in_specs=[
                pl.BlockSpec((block_t, bt, Dc), lambda b, t: (t, b, 0)),
                _const_spec((Dc, H3), lambda b, t: (0, 0)),
                _const_spec((Hp, H3), lambda b, t: (0, 0)),
                _const_spec((1, H3), lambda b, t: (0, 0)),
                _const_spec((1, Hp), lambda b, t: (0, 0)),
            ],
            out_specs=pl.BlockSpec((bt, block_t, Hp), lambda b, t: (b, t, 0)),
            scratch_shapes=[
                pltpu.VMEM((bt, Hp), jnp.float32),           # carried h state
                pltpu.VMEM((block_t, bt, H3), jnp.float32),  # hoisted gx block
            ],
        ),
        compiler_params=pltpu.CompilerParams(
            dimension_semantics=("parallel", "arbitrary"),
            vmem_limit_bytes=vmem_limit,
        ),
    )(x_sbd, wih, whh, bx, bhn)


# ---------------------------------------------------------------------------
# Kernel 2: Linear projection + log_softmax, vocab-tiled.
# Grid = (row_tiles, vocab_tiles); raw logits for the current row tile are
# accumulated in an f32 VMEM scratch across vocab tiles; the full-row softmax
# normalization happens on the last vocab tile and is written once (bf16).
# Padded vocab columns carry a -1e30 bias so they vanish in the softmax.
# ---------------------------------------------------------------------------
def proj_logsoftmax_kernel(h_ref, w_ref, b_ref, o_ref, logits_sc):
    j = pl.program_id(1)
    vt = w_ref.shape[-1]
    off = pl.multiple_of(j * vt, vt)
    logits_sc[:, pl.ds(off, vt)] = (
        jnp.dot(h_ref[...], w_ref[...], preferred_element_type=jnp.float32)
        + b_ref[...])

    @pl.when(j == pl.num_programs(1) - 1)
    def _():
        logits = logits_sc[...]
        m = jnp.max(logits, axis=-1, keepdims=True)
        s = logits - m
        lse = jnp.log(jnp.sum(jnp.exp(s), axis=-1, keepdims=True))
        o_ref[...] = (s - lse).astype(o_ref.dtype)


def run_proj(h_rows, w_out, b_out, *, row_tile, v_tile, out_dtype, vmem_limit):
    N, Hp = h_rows.shape
    Vp = w_out.shape[-1]
    if v_tile == Vp:
        # Whole weight resident and constant-index -> single buffer it.
        w_spec = _const_spec((Hp, v_tile), lambda i, j: (0, j))
        b_spec = _const_spec((1, v_tile), lambda i, j: (0, j))
    else:
        # Vocab-tiled: weight tiles stream, keep default double-buffering.
        w_spec = pl.BlockSpec((Hp, v_tile), lambda i, j: (0, j))
        b_spec = pl.BlockSpec((1, v_tile), lambda i, j: (0, j))
    return pl.pallas_call(
        proj_logsoftmax_kernel,
        out_shape=jax.ShapeDtypeStruct((N, Vp), out_dtype),
        grid_spec=pltpu.PrefetchScalarGridSpec(
            num_scalar_prefetch=0,
            grid=(N // row_tile, Vp // v_tile),
            in_specs=[
                pl.BlockSpec((row_tile, Hp), lambda i, j: (i, 0)),
                w_spec,
                b_spec,
            ],
            out_specs=pl.BlockSpec((row_tile, Vp), lambda i, j: (i, 0)),
            scratch_shapes=[pltpu.VMEM((row_tile, Vp), jnp.float32)],
        ),
        compiler_params=pltpu.CompilerParams(
            dimension_semantics=("parallel", "arbitrary"),
            vmem_limit_bytes=vmem_limit,
        ),
    )(h_rows, w_out, b_out)


# ---------------------------------------------------------------------------
# VMEM-aware tile pickers.
# ---------------------------------------------------------------------------
def _pick_gru_block_t(S, bt, Dc, Hp, budget):
    H3 = 3 * Hp
    fixed = (Dc * H3 + Hp * H3 + H3 + Hp) * 2 + bt * Hp * 4   # 1x bf16 weights + f32 h
    pick = 8
    for T in (64, 32, 16, 8):
        var = T * bt * (2 * Dc * 2 + 2 * Hp * 2 + H3 * 4)     # x/out (2-buf) + f32 gx
        if fixed + var <= budget:
            pick = T
            break
    return min(pick, _round_up(S, 8))


def _pick_proj_tiles(n_rows, Hp, Vp, out_itemsize, budget):
    v_target = 2048
    if Vp <= v_target:
        v_tile = Vp
    else:
        v_tile = 128                        # Vp is always a multiple of 128
        t = 256
        while t <= v_target:
            if Vp % t == 0:
                v_tile = t
            t += 128
    w_bufs = 1 if v_tile == Vp else 2
    fixed = w_bufs * (Hp * v_tile * 2 + v_tile * 4)
    rt = 256
    while rt > 8:
        per = rt * (Vp * 4 + 2 * Vp * out_itemsize + 2 * Hp * 2)
        if fixed + per <= budget:
            break
        rt //= 2
    rt = min(max(rt, 8), _round_up(n_rows, 8))
    return rt, v_tile


# ---------------------------------------------------------------------------
# Parameter preparation: fuse gates, fold biases, pad to (8, 128), cast bf16.
# ---------------------------------------------------------------------------
def prepare_params(params):
    """Logical layout expected (PyTorch GRU weights split per gate, transposed):
         w_ih: (3, Dc, H), w_hh: (3, H, H), b_ih/b_hh: (3, 1, H)  order (r,z,n)
         w_out: (H, V), b_out: (1, V)
    """
    w_ih, w_hh = params["w_ih"], params["w_hh"]
    b_ih, b_hh = params["b_ih"], params["b_hh"]
    w_out, b_out = params["w_out"], params["b_out"]
    Dc, H = w_ih.shape[1], w_ih.shape[2]
    V = w_out.shape[1]
    Hp = _round_up(H, 128)
    Vp = _round_up(V, 128)

    def pad2(a, rows, cols):
        return jnp.pad(a, ((0, rows - a.shape[0]), (0, cols - a.shape[1])))

    wih_f = jnp.concatenate([pad2(w_ih[g], Dc, Hp) for g in range(3)], axis=1)
    whh_f = jnp.concatenate([pad2(w_hh[g], H, Hp) for g in range(3)], axis=1)
    whh_f = jnp.pad(whh_f, ((0, Hp - H), (0, 0)))

    bx = jnp.concatenate([
        pad2(b_ih[0] + b_hh[0], 1, Hp),   # reset : b_ir + b_hr (folded)
        pad2(b_ih[1] + b_hh[1], 1, Hp),   # update: b_iz + b_hz (folded)
        pad2(b_ih[2], 1, Hp),             # new   : b_in only
    ], axis=1)
    bhn = pad2(b_hh[2], 1, Hp)

    w_out_p = pad2(w_out, Hp, Vp).astype(jnp.bfloat16)
    b_out_p = jnp.full((1, Vp), -1e30, jnp.float32).at[:, :V].set(b_out[0])

    return {
        "wih": wih_f.astype(jnp.bfloat16),
        "whh": whh_f.astype(jnp.bfloat16),
        "bx": bx.astype(jnp.float32),
        "bhn": bhn.astype(jnp.float32),
        "wout": w_out_p,
        "bout": b_out_p,
        "Hp": Hp, "Vp": Vp, "V": V,
    }


# ---------------------------------------------------------------------------
# Full forward.  XLA-side glue is layout-only (bf16 cast + transpose/pad of x,
# a free contiguous reshape of the batch-major hidden sequence); neither the
# hidden sequence nor the (B, S, V) output is ever transposed in XLA.
# ---------------------------------------------------------------------------
def gru_generator_forward(x, kp, *, out_dtype=jnp.bfloat16):
    B, S, _ = x.shape
    Hp, Vp, V = kp["Hp"], kp["Vp"], kp["V"]
    Dc = x.shape[-1]

    vmem_limit = _vmem_limit_bytes()
    budget = int(vmem_limit * 0.75)          # headroom for compiler scratch

    Bp = _round_up(B, 8)
    batch_tiles = 2 if (Bp >= 16 and _num_tensorcores() >= 2) else 1
    bt = Bp // batch_tiles
    block_t = _pick_gru_block_t(S, bt, Dc, Hp, budget)
    Sp = _round_up(S, block_t)

    # bf16 before the layout pass: halves HBM traffic of the transpose+pad.
    x_t = jnp.pad(jnp.transpose(x.astype(jnp.bfloat16), (1, 0, 2)),
                  ((0, Sp - S), (0, Bp - B), (0, 0)))            # (Sp, Bp, Dc)

    h_seq = run_gru(x_t, kp["wih"], kp["whh"], kp["bx"], kp["bhn"],
                    block_t=block_t, batch_tiles=batch_tiles,
                    vmem_limit=vmem_limit)                       # (Bp,Sp,Hp) bf16

    h_rows = h_seq.reshape(Bp * Sp, Hp)      # batch-major already: free reshape
    n_rows = Bp * Sp
    row_tile, v_tile = _pick_proj_tiles(
        n_rows, Hp, Vp, jnp.dtype(out_dtype).itemsize, budget)
    n_pad = _round_up(n_rows, row_tile)
    if n_pad != n_rows:
        h_rows = jnp.pad(h_rows, ((0, n_pad - n_rows), (0, 0)))

    logp = run_proj(h_rows, kp["wout"], kp["bout"],
                    row_tile=row_tile, v_tile=v_tile,
                    out_dtype=out_dtype, vmem_limit=vmem_limit)  # (n_pad, Vp)
    logp = logp[:n_rows].reshape(Bp, Sp, Vp)
    return logp[:B, :S, :V]                                      # (B, S, V)


# ---------------------------------------------------------------------------
# Pure-JAX reference (f32 throughout) for the correctness check.
# ---------------------------------------------------------------------------
def gru_generator_ref(x_bsd, params):
    x_sbd = jnp.transpose(x_bsd, (1, 0, 2)).astype(jnp.float32)
    w_ih, w_hh = params["w_ih"], params["w_hh"]
    b_ih, b_hh = params["b_ih"], params["b_hh"]
    B = x_bsd.shape[0]
    H = w_hh.shape[-1]

    def step(h, x_t):
        r = jax.nn.sigmoid(x_t @ w_ih[0] + b_ih[0] + h @ w_hh[0] + b_hh[0])
        z = jax.nn.sigmoid(x_t @ w_ih[1] + b_ih[1] + h @ w_hh[1] + b_hh[1])
        n = jnp.tanh(x_t @ w_ih[2] + b_ih[2] + r * (h @ w_hh[2] + b_hh[2]))
        h_new = (1.0 - z) * n + z * h
        return h_new, h_new

    _, hs = jax.lax.scan(step, jnp.zeros((B, H), jnp.float32), x_sbd)  # (S,B,H)
    logits = hs @ params["w_out"] + params["b_out"][0]
    out = jax.nn.log_softmax(logits, axis=-1)
    return jnp.transpose(out, (1, 0, 2))                               # (B,S,V)


def init_params(key, d_in, d_model, voc_size):
    ks = jax.random.split(key, 6)
    scale = 1.0 / jnp.sqrt(jnp.float32(d_model))
    return {
        "w_ih": jax.random.uniform(ks[0], (3, d_in, d_model), jnp.float32, -scale, scale),
        "w_hh": jax.random.uniform(ks[1], (3, d_model, d_model), jnp.float32, -scale, scale),
        "b_ih": jax.random.uniform(ks[2], (3, 1, d_model), jnp.float32, -scale, scale),
        "b_hh": jax.random.uniform(ks[3], (3, 1, d_model), jnp.float32, -scale, scale),
        "w_out": jax.random.uniform(ks[4], (d_model, voc_size), jnp.float32, -scale, scale),
        "b_out": jax.random.uniform(ks[5], (1, voc_size), jnp.float32, -scale, scale),
    }


def _check(B, S, Dc, D_MODEL, VOC, key, label):
    k_x, k_p = jax.random.split(key)
    x = jax.random.normal(k_x, (B, S, Dc), jnp.float32)
    params = init_params(k_p, Dc, D_MODEL, VOC)
    kparams = prepare_params(params)

    out = jax.block_until_ready(gru_generator_forward(x, kparams))
    assert out.shape == (B, S, VOC), (label, out.shape)

    out_f32 = out.astype(jnp.float32)
    ref = gru_generator_ref(x, params)
    max_err = float(jnp.max(jnp.abs(out_f32 - ref)))
    assert jnp.allclose(out_f32, ref, atol=3e-2, rtol=3e-2), (label, max_err)
    # rows of log_softmax should exponentiate-sum to 1 (bf16 output tolerance)
    assert jnp.allclose(jnp.exp(out_f32).sum(-1), 1.0, atol=2e-2), label


if __name__ == "__main__":
    key = jax.random.PRNGKey(0)
    k1, k2 = jax.random.split(key)
    # Small case: single tile along every axis.
    _check(B=2, S=8, Dc=16, D_MODEL=32, VOC=64, key=k1, label="small")
    # Exercises carried-h across multiple time blocks, multiple projection row
    # tiles and the vocab-tiled log-softmax path (Vp = 2176 -> 17 vocab tiles).
    _check(B=10, S=80, Dc=16, D_MODEL=32, VOC=2100, key=k2, label="tiled")
    print("KERNEL_OK")
</pallas_src>

<mosaic_0001>
module attributes {stable_mosaic.version = 11 : i64} {
  func.func @gru_block_kernel(%arg0: i32, %arg1: i32, %arg2: memref<8x8x16xbf16, #tpu.memory_space<vmem>>, %arg3: memref<16x384xbf16, #tpu.memory_space<vmem>>, %arg4: memref<128x384xbf16, #tpu.memory_space<vmem>>, %arg5: memref<1x384xf32, #tpu.memory_space<vmem>>, %arg6: memref<1x128xf32, #tpu.memory_space<vmem>>, %arg7: memref<8x8x128xbf16, #tpu.memory_space<vmem>>, %arg8: memref<8x128xf32, #tpu.memory_space<vmem>>, %arg9: memref<8x8x384xf32, #tpu.memory_space<vmem>>) attributes {dimension_semantics = [#tpu.dimension_semantics<parallel>, #tpu.dimension_semantics<arbitrary>], iteration_bounds = array<i64: 1, 1>, scalar_prefetch = 0 : i64, scratch_operands = 2 : i64, tpu.core_type = #tpu.core_type<tc>, window_params = [{transform_indices = @transform_0, window_bounds = array<i64: 8, 8, 16>}, {pipeline_mode = #tpu.pipeline_mode<synchronous>, transform_indices = @transform_1, window_bounds = array<i64: 16, 384>}, {pipeline_mode = #tpu.pipeline_mode<synchronous>, transform_indices = @transform_2, window_bounds = array<i64: 128, 384>}, {pipeline_mode = #tpu.pipeline_mode<synchronous>, transform_indices = @transform_3, window_bounds = array<i64: 1, 384>}, {pipeline_mode = #tpu.pipeline_mode<synchronous>, transform_indices = @transform_4, window_bounds = array<i64: 1, 128>}, {transform_indices = @transform_5, window_bounds = array<i64: 8, 8, 128>}]} {
    %c0_i32 = arith.constant 0 : i32
    %0 = arith.cmpi eq, %arg1, %c0_i32 : i32
    %1 = arith.extui %0 : i1 to i32
    %c0_i32_0 = arith.constant 0 : i32
    %2 = arith.cmpi ne, %1, %c0_i32_0 : i32
    scf.if %2 {
      %cst_83 = arith.constant 0.000000e+00 : f32
      %312 = vector.broadcast %cst_83 : f32 to vector<8x128xf32>
      %c0_84 = arith.constant 0 : index
      %c0_85 = arith.constant 0 : index
      %313 = vector.load %arg8[%c0_84, %c0_85] : memref<8x128xf32, #tpu.memory_space<vmem>>, vector<8x128xf32>
      tpu.vector_store %arg8[%c0_84, %c0_85], %312 {strides = array<i32>} : memref<8x128xf32, #tpu.memory_space<vmem>>, vector<8x128xf32>,
    } else {
    }
    %c0 = arith.constant 0 : index
    %c0_1 = arith.constant 0 : index
    %c0_2 = arith.constant 0 : index
    %3 = vector.load %arg2[%c0, %c0_1, %c0_2] : memref<8x8x16xbf16, #tpu.memory_space<vmem>>, vector<8x8x16xbf16>
    %4 = vector.shape_cast %3 : vector<8x8x16xbf16> to vector<64x16xbf16>
    %c0_3 = arith.constant 0 : index
    %c0_4 = arith.constant 0 : index
    %5 = vector.load %arg3[%c0_3, %c0_4] : memref<16x384xbf16, #tpu.memory_space<vmem>>, vector<16x384xbf16>
    %cst = arith.constant dense<0.000000e+00> : vector<64x384xf32>
    %6 = tpu.matmul %4, %5, %cst {dimension_numbers = #tpu.dot_dimension_numbers<[1], [0], [0], [1], [0, 0, 1, 1], [], []>} : vector<64x16xbf16>, vector<16x384xbf16>, vector<64x384xf32> -> vector<64x384xf32>
    %c0_5 = arith.constant 0 : index
    %c0_6 = arith.constant 0 : index
    %7 = vector.load %arg5[%c0_5, %c0_6] : memref<1x384xf32, #tpu.memory_space<vmem>>, vector<1x384xf32>
    %8 = vector.broadcast %7 : vector<1x384xf32> to vector<64x384xf32>
    %9 = arith.addf %6, %8 : vector<64x384xf32>
    %10 = vector.shape_cast %9 : vector<64x384xf32> to vector<8x8x384xf32>
    %c0_7 = arith.constant 0 : index
    %c0_8 = arith.constant 0 : index
    %c0_9 = arith.constant 0 : index
    %11 = vector.load %arg9[%c0_7, %c0_8, %c0_9] : memref<8x8x384xf32, #tpu.memory_space<vmem>>, vector<8x8x384xf32>
    tpu.vector_store %arg9[%c0_7, %c0_8, %c0_9], %10 {strides = array<i32>} : memref<8x8x384xf32, #tpu.memory_space<vmem>>, vector<8x8x384xf32>,
    %c0_10 = arith.constant 0 : index
    %c0_11 = arith.constant 0 : index
    %12 = vector.load %arg4[%c0_10, %c0_11] : memref<128x384xbf16, #tpu.memory_space<vmem>>, vector<128x384xbf16>
    %c0_12 = arith.constant 0 : index
    %c0_13 = arith.constant 0 : index
    %13 = vector.load %arg6[%c0_12, %c0_13] : memref<1x128xf32, #tpu.memory_space<vmem>>, vector<1x128xf32>
    %c0_14 = arith.constant 0 : index
    %c0_15 = arith.constant 0 : index
    %14 = vector.load %arg8[%c0_14, %c0_15] : memref<8x128xf32, #tpu.memory_space<vmem>>, vector<8x128xf32>
    %c0_i32_16 = arith.constant 0 : i32
    %15 = arith.index_cast %c0_i32_16 : i32 to index
    %c0_17 = arith.constant 0 : index
    %c0_18 = arith.constant 0 : index
    %16 = vector.load %arg9[%15, %c0_17, %c0_18] : memref<8x8x384xf32, #tpu.memory_space<vmem>>, vector<1x8x384xf32>
    %17 = vector.shape_cast %16 : vector<1x8x384xf32> to vector<8x384xf32>
    %18 = arith.truncf %14 : vector<8x128xf32> to vector<8x128xbf16>
    %cst_19 = arith.constant dense<0.000000e+00> : vector<8x384xf32>
    %19 = tpu.matmul %18, %12, %cst_19 {dimension_numbers = #tpu.dot_dimension_numbers<[1], [0], [0], [1], [0, 0, 1, 1], [], []>} : vector<8x128xbf16>, vector<128x384xbf16>, vector<8x384xf32> -> vector<8x384xf32>
    %20 = vector.extract_strided_slice %17 {offsets = [0, 0], sizes = [8, 128], strides = [1, 1]} : vector<8x384xf32> to vector<8x128xf32>
    %21 = vector.extract_strided_slice %19 {offsets = [0, 0], sizes = [8, 128], strides = [1, 1]} : vector<8x384xf32> to vector<8x128xf32>
    %22 = arith.addf %20, %21 : vector<8x128xf32>
    %23 = arith.negf %22 : vector<8x128xf32>
    %24 = math.exp %23 : vector<8x128xf32>
    %cst_20 = arith.constant 1.000000e+00 : f32
    %25 = vector.broadcast %cst_20 : f32 to vector<8x128xf32>
    %26 = arith.addf %25, %24 : vector<8x128xf32>
    %27 = arith.divf %25, %26 : vector<8x128xf32>
    %28 = vector.extract_strided_slice %17 {offsets = [0, 128], sizes = [8, 128], strides = [1, 1]} : vector<8x384xf32> to vector<8x128xf32>
    %29 = vector.extract_strided_slice %19 {offsets = [0, 128], sizes = [8, 128], strides = [1, 1]} : vector<8x384xf32> to vector<8x128xf32>
    %30 = arith.addf %28, %29 : vector<8x128xf32>
    %31 = arith.negf %30 : vector<8x128xf32>
    %32 = math.exp %31 : vector<8x128xf32>
    %cst_21 = arith.constant 1.000000e+00 : f32
    %33 = vector.broadcast %cst_21 : f32 to vector<8x128xf32>
    %34 = arith.addf %33, %32 : vector<8x128xf32>
    %35 = arith.divf %33, %34 : vector<8x128xf32>
    %36 = vector.extract_strided_slice %17 {offsets = [0, 256], sizes = [8, 128], strides = [1, 1]} : vector<8x384xf32> to vector<8x128xf32>
    %37 = vector.extract_strided_slice %19 {offsets = [0, 256], sizes = [8, 128], strides = [1, 1]} : vector<8x384xf32> to vector<8x128xf32>
    %38 = vector.broadcast %13 : vector<1x128xf32> to vector<8x128xf32>
    %39 = arith.addf %37, %38 : vector<8x128xf32>
    %40 = arith.mulf %27, %39 : vector<8x128xf32>
    %41 = arith.addf %36, %40 : vector<8x128xf32>
    %42 = math.tanh %41 : vector<8x128xf32>
    %cst_22 = arith.constant 1.000000e+00 : f32
    %43 = vector.broadcast %cst_22 : f32 to vector<8x128xf32>
    %44 = arith.subf %43, %35 : vector<8x128xf32>
    %45 = arith.mulf %44, %42 : vector<8x128xf32>
    %46 = arith.mulf %35, %14 : vector<8x128xf32>
    %47 = arith.addf %45, %46 : vector<8x128xf32>
    %48 = arith.truncf %47 : vector<8x128xf32> to vector<8x128xbf16>
    %49 = vector.shape_cast %48 : vector<8x128xbf16> to vector<8x1x128xbf16>
    %c0_23 = arith.constant 0 : index
    %50 = arith.index_cast %c0_i32_16 : i32 to index
    %c0_24 = arith.constant 0 : index
    %51 = vector.load %arg7[%c0_23, %50, %c0_24] : memref<8x8x128xbf16, #tpu.memory_space<vmem>>, vector<8x1x128xbf16>
    tpu.vector_store %arg7[%c0_23, %50, %c0_24], %49 {strides = array<i32>} : memref<8x8x128xbf16, #tpu.memory_space<vmem>>, vector<8x1x128xbf16>,
    %c1_i32 = arith.constant 1 : i32
    %52 = arith.index_cast %c1_i32 : i32 to index
    %c0_25 = arith.constant 0 : index
    %c0_26 = arith.constant 0 : index
    %53 = vector.load %arg9[%52, %c0_25, %c0_26] : memref<8x8x384xf32, #tpu.memory_space<vmem>>, vector<1x8x384xf32>
    %54 = vector.shape_cast %53 : vector<1x8x384xf32> to vector<8x384xf32>
    %55 = arith.truncf %47 : vector<8x128xf32> to vector<8x128xbf16>
    %cst_27 = arith.constant dense<0.000000e+00> : vector<8x384xf32>
    %56 = tpu.matmul %55, %12, %cst_27 {dimension_numbers = #tpu.dot_dimension_numbers<[1], [0], [0], [1], [0, 0, 1, 1], [], []>} : vector<8x128xbf16>, vector<128x384xbf16>, vector<8x384xf32> -> vector<8x384xf32>
    %57 = vector.extract_strided_slice %54 {offsets = [0, 0], sizes = [8, 128], strides = [1, 1]} : vector<8x384xf32> to vector<8x128xf32>
    %58 = vector.extract_strided_slice %56 {offsets = [0, 0], sizes = [8, 128], strides = [1, 1]} : vector<8x384xf32> to vector<8x128xf32>
    %59 = arith.addf %57, %58 : vector<8x128xf32>
    %60 = arith.negf %59 : vector<8x128xf32>
    %61 = math.exp %60 : vector<8x128xf32>
    %cst_28 = arith.constant 1.000000e+00 : f32
    %62 = vector.broadcast %cst_28 : f32 to vector<8x128xf32>
    %63 = arith.addf %62, %61 : vector<8x128xf32>
    %64 = arith.divf %62, %63 : vector<8x128xf32>
    %65 = vector.extract_strided_slice %54 {offsets = [0, 128], sizes = [8, 128], strides = [1, 1]} : vector<8x384xf32> to vector<8x128xf32>
    %66 = vector.extract_strided_slice %56 {offsets = [0, 128], sizes = [8, 128], strides = [1, 1]} : vector<8x384xf32> to vector<8x128xf32>
    %67 = arith.addf %65, %66 : vector<8x128xf32>
    %68 = arith.negf %67 : vector<8x128xf32>
    %69 = math.exp %68 : vector<8x128xf32>
    %cst_29 = arith.constant 1.000000e+00 : f32
    %70 = vector.broadcast %cst_29 : f32 to vector<8x128xf32>
    %71 = arith.addf %70, %69 : vector<8x128xf32>
    %72 = arith.divf %70, %71 : vector<8x128xf32>
    %73 = vector.extract_strided_slice %54 {offsets = [0, 256], sizes = [8, 128], strides = [1, 1]} : vector<8x384xf32> to vector<8x128xf32>
    %74 = vector.extract_strided_slice %56 {offsets = [0, 256], sizes = [8, 128], strides = [1, 1]} : vector<8x384xf32> to vector<8x128xf32>
    %75 = vector.broadcast %13 : vector<1x128xf32> to vector<8x128xf32>
    %76 = arith.addf %74, %75 : vector<8x128xf32>
    %77 = arith.mulf %64, %76 : vector<8x128xf32>
    %78 = arith.addf %73, %77 : vector<8x128xf32>
    %79 = math.tanh %78 : vector<8x128xf32>
    %cst_30 = arith.constant 1.000000e+00 : f32
    %80 = vector.broadcast %cst_30 : f32 to vector<8x128xf32>
    %81 = arith.subf %80, %72 : vector<8x128xf32>
    %82 = arith.mulf %81, %79 : vector<8x128xf32>
    %83 = arith.mulf %72, %47 : vector<8x128xf32>
    %84 = arith.addf %82, %83 : vector<8x128xf32>
    %85 = arith.truncf %84 : vector<8x128xf32> to vector<8x128xbf16>
    %86 = vector.shape_cast %85 : vector<8x128xbf16> to vector<8x1x128xbf16>
    %c0_31 = arith.constant 0 : index
    %87 = arith.index_cast %c1_i32 : i32 to index
    %c0_32 = arith.constant 0 : index
    %88 = vector.load %arg7[%c0_31, %87, %c0_32] : memref<8x8x128xbf16, #tpu.memory_space<vmem>>, vector<8x1x128xbf16>
    tpu.vector_store %arg7[%c0_31, %87, %c0_32], %86 {strides = array<i32>} : memref<8x8x128xbf16, #tpu.memory_space<vmem>>, vector<8x1x128xbf16>,
    %c2_i32 = arith.constant 2 : i32
    %89 = arith.index_cast %c2_i32 : i32 to index
    %c0_33 = arith.constant 0 : index
    %c0_34 = arith.constant 0 : index
    %90 = vector.load %arg9[%89, %c0_33, %c0_34] : memref<8x8x384xf32, #tpu.memory_space<vmem>>, vector<1x8x384xf32>
    %91 = vector.shape_cast %90 : vector<1x8x384xf32> to vector<8x384xf32>
    %92 = arith.truncf %84 : vector<8x128xf32> to vector<8x128xbf16>
    %cst_35 = arith.constant dense<0.000000e+00> : vector<8x384xf32>
    %93 = tpu.matmul %92, %12, %cst_35 {dimension_numbers = #tpu.dot_dimension_numbers<[1], [0], [0], [1], [0, 0, 1, 1], [], []>} : vector<8x128xbf16>, vector<128x384xbf16>, vector<8x384xf32> -> vector<8x384xf32>
    %94 = vector.extract_strided_slice %91 {offsets = [0, 0], sizes = [8, 128], strides = [1, 1]} : vector<8x384xf32> to vector<8x128xf32>
    %95 = vector.extract_strided_slice %93 {offsets = [0, 0], sizes = [8, 128], strides = [1, 1]} : vector<8x384xf32> to vector<8x128xf32>
    %96 = arith.addf %94, %95 : vector<8x128xf32>
    %97 = arith.negf %96 : vector<8x128xf32>
    %98 = math.exp %97 : vector<8x128xf32>
    %cst_36 = arith.constant 1.000000e+00 : f32
    %99 = vector.broadcast %cst_36 : f32 to vector<8x128xf32>
    %100 = arith.addf %99, %98 : vector<8x128xf32>
    %101 = arith.divf %99, %100 : vector<8x128xf32>
    %102 = vector.extract_strided_slice %91 {offsets = [0, 128], sizes = [8, 128], strides = [1, 1]} : vector<8x384xf32> to vector<8x128xf32>
    %103 = vector.extract_strided_slice %93 {offsets = [0, 128], sizes = [8, 128], strides = [1, 1]} : vector<8x384xf32> to vector<8x128xf32>
    %104 = arith.addf %102, %103 : vector<8x128xf32>
    %105 = arith.negf %104 : vector<8x128xf32>
    %106 = math.exp %105 : vector<8x128xf32>
    %cst_37 = arith.constant 1.000000e+00 : f32
    %107 = vector.broadcast %cst_37 : f32 to vector<8x128xf32>
    %108 = arith.addf %107, %106 : vector<8x128xf32>
    %109 = arith.divf %107, %108 : vector<8x128xf32>
    %110 = vector.extract_strided_slice %91 {offsets = [0, 256], sizes = [8, 128], strides = [1, 1]} : vector<8x384xf32> to vector<8x128xf32>
    %111 = vector.extract_strided_slice %93 {offsets = [0, 256], sizes = [8, 128], strides = [1, 1]} : vector<8x384xf32> to vector<8x128xf32>
    %112 = vector.broadcast %13 : vector<1x128xf32> to vector<8x128xf32>
    %113 = arith.addf %111, %112 : vector<8x128xf32>
    %114 = arith.mulf %101, %113 : vector<8x128xf32>
    %115 = arith.addf %110, %114 : vector<8x128xf32>
    %116 = math.tanh %115 : vector<8x128xf32>
    %cst_38 = arith.constant 1.000000e+00 : f32
    %117 = vector.broadcast %cst_38 : f32 to vector<8x128xf32>
    %118 = arith.subf %117, %109 : vector<8x128xf32>
    %119 = arith.mulf %118, %116 : vector<8x128xf32>
    %120 = arith.mulf %109, %84 : vector<8x128xf32>
    %121 = arith.addf %119, %120 : vector<8x128xf32>
    %122 = arith.truncf %121 : vector<8x128xf32> to vector<8x128xbf16>
    %123 = vector.shape_cast %122 : vector<8x128xbf16> to vector<8x1x128xbf16>
    %c0_39 = arith.constant 0 : index
    %124 = arith.index_cast %c2_i32 : i32 to index
    %c0_40 = arith.constant 0 : index
    %125 = vector.load %arg7[%c0_39, %124, %c0_40] : memref<8x8x128xbf16, #tpu.memory_space<vmem>>, vector<8x1x128xbf16>
    tpu.vector_store %arg7[%c0_39, %124, %c0_40], %123 {strides = array<i32>} : memref<8x8x128xbf16, #tpu.memory_space<vmem>>, vector<8x1x128xbf16>,
    %c3_i32 = arith.constant 3 : i32
    %126 = arith.index_cast %c3_i32 : i32 to index
    %c0_41 = arith.constant 0 : index
    %c0_42 = arith.constant 0 : index
    %127 = vector.load %arg9[%126, %c0_41, %c0_42] : memref<8x8x384xf32, #tpu.memory_space<vmem>>, vector<1x8x384xf32>
    %128 = vector.shape_cast %127 : vector<1x8x384xf32> to vector<8x384xf32>
    %129 = arith.truncf %121 : vector<8x128xf32> to vector<8x128xbf16>
    %cst_43 = arith.constant dense<0.000000e+00> : vector<8x384xf32>
    %130 = tpu.matmul %129, %12, %cst_43 {dimension_numbers = #tpu.dot_dimension_numbers<[1], [0], [0], [1], [0, 0, 1, 1], [], []>} : vector<8x128xbf16>, vector<128x384xbf16>, vector<8x384xf32> -> vector<8x384xf32>
    %131 = vector.extract_strided_slice %128 {offsets = [0, 0], sizes = [8, 128], strides = [1, 1]} : vector<8x384xf32> to vector<8x128xf32>
    %132 = vector.extract_strided_slice %130 {offsets = [0, 0], sizes = [8, 128], strides = [1, 1]} : vector<8x384xf32> to vector<8x128xf32>
    %133 = arith.addf %131, %132 : vector<8x128xf32>
    %134 = arith.negf %133 : vector<8x128xf32>
    %135 = math.exp %134 : vector<8x128xf32>
    %cst_44 = arith.constant 1.000000e+00 : f32
    %136 = vector.broadcast %cst_44 : f32 to vector<8x128xf32>
    %137 = arith.addf %136, %135 : vector<8x128xf32>
    %138 = arith.divf %136, %137 : vector<8x128xf32>
    %139 = vector.extract_strided_slice %128 {offsets = [0, 128], sizes = [8, 128], strides = [1, 1]} : vector<8x384xf32> to vector<8x128xf32>
    %140 = vector.extract_strided_slice %130 {offsets = [0, 128], sizes = [8, 128], strides = [1, 1]} : vector<8x384xf32> to vector<8x128xf32>
    %141 = arith.addf %139, %140 : vector<8x128xf32>
    %142 = arith.negf %141 : vector<8x128xf32>
    %143 = math.exp %142 : vector<8x128xf32>
    %cst_45 = arith.constant 1.000000e+00 : f32
    %144 = vector.broadcast %cst_45 : f32 to vector<8x128xf32>
    %145 = arith.addf %144, %143 : vector<8x128xf32>
    %146 = arith.divf %144, %145 : vector<8x128xf32>
    %147 = vector.extract_strided_slice %128 {offsets = [0, 256], sizes = [8, 128], strides = [1, 1]} : vector<8x384xf32> to vector<8x128xf32>
    %148 = vector.extract_strided_slice %130 {offsets = [0, 256], sizes = [8, 128], strides = [1, 1]} : vector<8x384xf32> to vector<8x128xf32>
    %149 = vector.broadcast %13 : vector<1x128xf32> to vector<8x128xf32>
    %150 = arith.addf %148, %149 : vector<8x128xf32>
    %151 = arith.mulf %138, %150 : vector<8x128xf32>
    %152 = arith.addf %147, %151 : vector<8x128xf32>
    %153 = math.tanh %152 : vector<8x128xf32>
    %cst_46 = arith.constant 1.000000e+00 : f32
    %154 = vector.broadcast %cst_46 : f32 to vector<8x128xf32>
    %155 = arith.subf %154, %146 : vector<8x128xf32>
    %156 = arith.mulf %155, %153 : vector<8x128xf32>
    %157 = arith.mulf %146, %121 : vector<8x128xf32>
    %158 = arith.addf %156, %157 : vector<8x128xf32>
    %159 = arith.truncf %158 : vector<8x128xf32> to vector<8x128xbf16>
    %160 = vector.shape_cast %159 : vector<8x128xbf16> to vector<8x1x128xbf16>
    %c0_47 = arith.constant 0 : index
    %161 = arith.index_cast %c3_i32 : i32 to index
    %c0_48 = arith.constant 0 : index
    %162 = vector.load %arg7[%c0_47, %161, %c0_48] : memref<8x8x128xbf16, #tpu.memory_space<vmem>>, vector<8x1x128xbf16>
    tpu.vector_store %arg7[%c0_47, %161, %c0_48], %160 {strides = array<i32>} : memref<8x8x128xbf16, #tpu.memory_space<vmem>>, vector<8x1x128xbf16>,
    %c4_i32 = arith.constant 4 : i32
    %163 = arith.index_cast %c4_i32 : i32 to index
    %c0_49 = arith.constant 0 : index
    %c0_50 = arith.constant 0 : index
    %164 = vector.load %arg9[%163, %c0_49, %c0_50] : memref<8x8x384xf32, #tpu.memory_space<vmem>>, vector<1x8x384xf32>
    %165 = vector.shape_cast %164 : vector<1x8x384xf32> to vector<8x384xf32>
    %166 = arith.truncf %158 : vector<8x128xf32> to vector<8x128xbf16>
    %cst_51 = arith.constant dense<0.000000e+00> : vector<8x384xf32>
    %167 = tpu.matmul %166, %12, %cst_51 {dimension_numbers = #tpu.dot_dimension_numbers<[1], [0], [0], [1], [0, 0, 1, 1], [], []>} : vector<8x128xbf16>, vector<128x384xbf16>, vector<8x384xf32> -> vector<8x384xf32>
    %168 = vector.extract_strided_slice %165 {offsets = [0, 0], sizes = [8, 128], strides = [1, 1]} : vector<8x384xf32> to vector<8x128xf32>
    %169 = vector.extract_strided_slice %167 {offsets = [0, 0], sizes = [8, 128], strides = [1, 1]} : vector<8x384xf32> to vector<8x128xf32>
    %170 = arith.addf %168, %169 : vector<8x128xf32>
    %171 = arith.negf %170 : vector<8x128xf32>
    %172 = math.exp %171 : vector<8x128xf32>
    %cst_52 = arith.constant 1.000000e+00 : f32
    %173 = vector.broadcast %cst_52 : f32 to vector<8x128xf32>
    %174 = arith.addf %173, %172 : vector<8x128xf32>
    %175 = arith.divf %173, %174 : vector<8x128xf32>
    %176 = vector.extract_strided_slice %165 {offsets = [0, 128], sizes = [8, 128], strides = [1, 1]} : vector<8x384xf32> to vector<8x128xf32>
    %177 = vector.extract_strided_slice %167 {offsets = [0, 128], sizes = [8, 128], strides = [1, 1]} : vector<8x384xf32> to vector<8x128xf32>
    %178 = arith.addf %176, %177 : vector<8x128xf32>
    %179 = arith.negf %178 : vector<8x128xf32>
    %180 = math.exp %179 : vector<8x128xf32>
    %cst_53 = arith.constant 1.000000e+00 : f32
    %181 = vector.broadcast %cst_53 : f32 to vector<8x128xf32>
    %182 = arith.addf %181, %180 : vector<8x128xf32>
    %183 = arith.divf %181, %182 : vector<8x128xf32>
    %184 = vector.extract_strided_slice %165 {offsets = [0, 256], sizes = [8, 128], strides = [1, 1]} : vector<8x384xf32> to vector<8x128xf32>
    %185 = vector.extract_strided_slice %167 {offsets = [0, 256], sizes = [8, 128], strides = [1, 1]} : vector<8x384xf32> to vector<8x128xf32>
    %186 = vector.broadcast %13 : vector<1x128xf32> to vector<8x128xf32>
    %187 = arith.addf %185, %186 : vector<8x128xf32>
    %188 = arith.mulf %175, %187 : vector<8x128xf32>
    %189 = arith.addf %184, %188 : vector<8x128xf32>
    %190 = math.tanh %189 : vector<8x128xf32>
    %cst_54 = arith.constant 1.000000e+00 : f32
    %191 = vector.broadcast %cst_54 : f32 to vector<8x128xf32>
    %192 = arith.subf %191, %183 : vector<8x128xf32>
    %193 = arith.mulf %192, %190 : vector<8x128xf32>
    %194 = arith.mulf %183, %158 : vector<8x128xf32>
    %195 = arith.addf %193, %194 : vector<8x128xf32>
    %196 = arith.truncf %195 : vector<8x128xf32> to vector<8x128xbf16>
    %197 = vector.shape_cast %196 : vector<8x128xbf16> to vector<8x1x128xbf16>
    %c0_55 = arith.constant 0 : index
    %198 = arith.index_cast %c4_i32 : i32 to index
    %c0_56 = arith.constant 0 : index
    %199 = vector.load %arg7[%c0_55, %198, %c0_56] : memref<8x8x128xbf16, #tpu.memory_space<vmem>>, vector<8x1x128xbf16>
    tpu.vector_store %arg7[%c0_55, %198, %c0_56], %197 {strides = array<i32>} : memref<8x8x128xbf16, #tpu.memory_space<vmem>>, vector<8x1x128xbf16>,
    %c5_i32 = arith.constant 5 : i32
    %200 = arith.index_cast %c5_i32 : i32 to index
    %c0_57 = arith.constant 0 : index
    %c0_58 = arith.constant 0 : index
    %201 = vector.load %arg9[%200, %c0_57, %c0_58] : memref<8x8x384xf32, #tpu.memory_space<vmem>>, vector<1x8x384xf32>
    %202 = vector.shape_cast %201 : vector<1x8x384xf32> to vector<8x384xf32>
    %203 = arith.truncf %195 : vector<8x128xf32> to vector<8x128xbf16>
    %cst_59 = arith.constant dense<0.000000e+00> : vector<8x384xf32>
    %204 = tpu.matmul %203, %12, %cst_59 {dimension_numbers = #tpu.dot_dimension_numbers<[1], [0], [0], [1], [0, 0, 1, 1], [], []>} : vector<8x128xbf16>, vector<128x384xbf16>, vector<8x384xf32> -> vector<8x384xf32>
    %205 = vector.extract_strided_slice %202 {offsets = [0, 0], sizes = [8, 128], strides = [1, 1]} : vector<8x384xf32> to vector<8x128xf32>
    %206 = vector.extract_strided_slice %204 {offsets = [0, 0], sizes = [8, 128], strides = [1, 1]} : vector<8x384xf32> to vector<8x128xf32>
    %207 = arith.addf %205, %206 : vector<8x128xf32>
    %208 = arith.negf %207 : vector<8x128xf32>
    %209 = math.exp %208 : vector<8x128xf32>
    %cst_60 = arith.constant 1.000000e+00 : f32
    %210 = vector.broadcast %cst_60 : f32 to vector<8x128xf32>
    %211 = arith.addf %210, %209 : vector<8x128xf32>
    %212 = arith.divf %210, %211 : vector<8x128xf32>
    %213 = vector.extract_strided_slice %202 {offsets = [0, 128], sizes = [8, 128], strides = [1, 1]} : vector<8x384xf32> to vector<8x128xf32>
    %214 = vector.extract_strided_slice %204 {offsets = [0, 128], sizes = [8, 128], strides = [1, 1]} : vector<8x384xf32> to vector<8x128xf32>
    %215 = arith.addf %213, %214 : vector<8x128xf32>
    %216 = arith.negf %215 : vector<8x128xf32>
    %217 = math.exp %216 : vector<8x128xf32>
    %cst_61 = arith.constant 1.000000e+00 : f32
    %218 = vector.broadcast %cst_61 : f32 to vector<8x128xf32>
    %219 = arith.addf %218, %217 : vector<8x128xf32>
    %220 = arith.divf %218, %219 : vector<8x128xf32>
    %221 = vector.extract_strided_slice %202 {offsets = [0, 256], sizes = [8, 128], strides = [1, 1]} : vector<8x384xf32> to vector<8x128xf32>
    %222 = vector.extract_strided_slice %204 {offsets = [0, 256], sizes = [8, 128], strides = [1, 1]} : vector<8x384xf32> to vector<8x128xf32>
    %223 = vector.broadcast %13 : vector<1x128xf32> to vector<8x128xf32>
    %224 = arith.addf %222, %223 : vector<8x128xf32>
    %225 = arith.mulf %212, %224 : vector<8x128xf32>
    %226 = arith.addf %221, %225 : vector<8x128xf32>
    %227 = math.tanh %226 : vector<8x128xf32>
    %cst_62 = arith.constant 1.000000e+00 : f32
    %228 = vector.broadcast %cst_62 : f32 to vector<8x128xf32>
    %229 = arith.subf %228, %220 : vector<8x128xf32>
    %230 = arith.mulf %229, %227 : vector<8x128xf32>
    %231 = arith.mulf %220, %195 : vector<8x128xf32>
    %232 = arith.addf %230, %231 : vector<8x128xf32>
    %233 = arith.truncf %232 : vector<8x128xf32> to vector<8x128xbf16>
    %234 = vector.shape_cast %233 : vector<8x128xbf16> to vector<8x1x128xbf16>
    %c0_63 = arith.constant 0 : index
    %235 = arith.index_cast %c5_i32 : i32 to index
    %c0_64 = arith.constant 0 : index
    %236 = vector.load %arg7[%c0_63, %235, %c0_64] : memref<8x8x128xbf16, #tpu.memory_space<vmem>>, vector<8x1x128xbf16>
    tpu.vector_store %arg7[%c0_63, %235, %c0_64], %234 {strides = array<i32>} : memref<8x8x128xbf16, #tpu.memory_space<vmem>>, vector<8x1x128xbf16>,
    %c6_i32 = arith.constant 6 : i32
    %237 = arith.index_cast %c6_i32 : i32 to index
    %c0_65 = arith.constant 0 : index
    %c0_66 = arith.constant 0 : index
    %238 = vector.load %arg9[%237, %c0_65, %c0_66] : memref<8x8x384xf32, #tpu.memory_space<vmem>>, vector<1x8x384xf32>
    %239 = vector.shape_cast %238 : vector<1x8x384xf32> to vector<8x384xf32>
    %240 = arith.truncf %232 : vector<8x128xf32> to vector<8x128xbf16>
    %cst_67 = arith.constant dense<0.000000e+00> : vector<8x384xf32>
    %241 = tpu.matmul %240, %12, %cst_67 {dimension_numbers = #tpu.dot_dimension_numbers<[1], [0], [0], [1], [0, 0, 1, 1], [], []>} : vector<8x128xbf16>, vector<128x384xbf16>, vector<8x384xf32> -> vector<8x384xf32>
    %242 = vector.extract_strided_slice %239 {offsets = [0, 0], sizes = [8, 128], strides = [1, 1]} : vector<8x384xf32> to vector<8x128xf32>
    %243 = vector.extract_strided_slice %241 {offsets = [0, 0], sizes = [8, 128], strides = [1, 1]} : vector<8x384xf32> to vector<8x128xf32>
    %244 = arith.addf %242, %243 : vector<8x128xf32>
    %245 = arith.negf %244 : vector<8x128xf32>
    %246 = math.exp %245 : vector<8x128xf32>
    %cst_68 = arith.constant 1.000000e+00 : f32
    %247 = vector.broadcast %cst_68 : f32 to vector<8x128xf32>
    %248 = arith.addf %247, %246 : vector<8x128xf32>
    %249 = arith.divf %247, %248 : vector<8x128xf32>
    %250 = vector.extract_strided_slice %239 {offsets = [0, 128], sizes = [8, 128], strides = [1, 1]} : vector<8x384xf32> to vector<8x128xf32>
    %251 = vector.extract_strided_slice %241 {offsets = [0, 128], sizes = [8, 128], strides = [1, 1]} : vector<8x384xf32> to vector<8x128xf32>
    %252 = arith.addf %250, %251 : vector<8x128xf32>
    %253 = arith.negf %252 : vector<8x128xf32>
    %254 = math.exp %253 : vector<8x128xf32>
    %cst_69 = arith.constant 1.000000e+00 : f32
    %255 = vector.broadcast %cst_69 : f32 to vector<8x128xf32>
    %256 = arith.addf %255, %254 : vector<8x128xf32>
    %257 = arith.divf %255, %256 : vector<8x128xf32>
    %258 = vector.extract_strided_slice %239 {offsets = [0, 256], sizes = [8, 128], strides = [1, 1]} : vector<8x384xf32> to vector<8x128xf32>
    %259 = vector.extract_strided_slice %241 {offsets = [0, 256], sizes = [8, 128], strides = [1, 1]} : vector<8x384xf32> to vector<8x128xf32>
    %260 = vector.broadcast %13 : vector<1x128xf32> to vector<8x128xf32>
    %261 = arith.addf %259, %260 : vector<8x128xf32>
    %262 = arith.mulf %249, %261 : vector<8x128xf32>
    %263 = arith.addf %258, %262 : vector<8x128xf32>
    %264 = math.tanh %263 : vector<8x128xf32>
    %cst_70 = arith.constant 1.000000e+00 : f32
    %265 = vector.broadcast %cst_70 : f32 to vector<8x128xf32>
    %266 = arith.subf %265, %257 : vector<8x128xf32>
    %267 = arith.mulf %266, %264 : vector<8x128xf32>
    %268 = arith.mulf %257, %232 : vector<8x128xf32>
    %269 = arith.addf %267, %268 : vector<8x128xf32>
    %270 = arith.truncf %269 : vector<8x128xf32> to vector<8x128xbf16>
    %271 = vector.shape_cast %270 : vector<8x128xbf16> to vector<8x1x128xbf16>
    %c0_71 = arith.constant 0 : index
    %272 = arith.index_cast %c6_i32 : i32 to index
    %c0_72 = arith.constant 0 : index
    %273 = vector.load %arg7[%c0_71, %272, %c0_72] : memref<8x8x128xbf16, #tpu.memory_space<vmem>>, vector<8x1x128xbf16>
    tpu.vector_store %arg7[%c0_71, %272, %c0_72], %271 {strides = array<i32>} : memref<8x8x128xbf16, #tpu.memory_space<vmem>>, vector<8x1x128xbf16>,
    %c7_i32 = arith.constant 7 : i32
    %274 = arith.index_cast %c7_i32 : i32 to index
    %c0_73 = arith.constant 0 : index
    %c0_74 = arith.constant 0 : index
    %275 = vector.load %arg9[%274, %c0_73, %c0_74] : memref<8x8x384xf32, #tpu.memory_space<vmem>>, vector<1x8x384xf32>
    %276 = vector.shape_cast %275 : vector<1x8x384xf32> to vector<8x384xf32>
    %277 = arith.truncf %269 : vector<8x128xf32> to vector<8x128xbf16>
    %cst_75 = arith.constant dense<0.000000e+00> : vector<8x384xf32>
    %278 = tpu.matmul %277, %12, %cst_75 {dimension_numbers = #tpu.dot_dimension_numbers<[1], [0], [0], [1], [0, 0, 1, 1], [], []>} : vector<8x128xbf16>, vector<128x384xbf16>, vector<8x384xf32> -> vector<8x384xf32>
    %279 = vector.extract_strided_slice %276 {offsets = [0, 0], sizes = [8, 128], strides = [1, 1]} : vector<8x384xf32> to vector<8x128xf32>
    %280 = vector.extract_strided_slice %278 {offsets = [0, 0], sizes = [8, 128], strides = [1, 1]} : vector<8x384xf32> to vector<8x128xf32>
    %281 = arith.addf %279, %280 : vector<8x128xf32>
    %282 = arith.negf %281 : vector<8x128xf32>
    %283 = math.exp %282 : vector<8x128xf32>
    %cst_76 = arith.constant 1.000000e+00 : f32
    %284 = vector.broadcast %cst_76 : f32 to vector<8x128xf32>
    %285 = arith.addf %284, %283 : vector<8x128xf32>
    %286 = arith.divf %284, %285 : vector<8x128xf32>
    %287 = vector.extract_strided_slice %276 {offsets = [0, 128], sizes = [8, 128], strides = [1, 1]} : vector<8x384xf32> to vector<8x128xf32>
    %288 = vector.extract_strided_slice %278 {offsets = [0, 128], sizes = [8, 128], strides = [1, 1]} : vector<8x384xf32> to vector<8x128xf32>
    %289 = arith.addf %287, %288 : vector<8x128xf32>
    %290 = arith.negf %289 : vector<8x128xf32>
    %291 = math.exp %290 : vector<8x128xf32>
    %cst_77 = arith.constant 1.000000e+00 : f32
    %292 = vector.broadcast %cst_77 : f32 to vector<8x128xf32>
    %293 = arith.addf %292, %291 : vector<8x128xf32>
    %294 = arith.divf %292, %293 : vector<8x128xf32>
    %295 = vector.extract_strided_slice %276 {offsets = [0, 256], sizes = [8, 128], strides = [1, 1]} : vector<8x384xf32> to vector<8x128xf32>
    %296 = vector.extract_strided_slice %278 {offsets = [0, 256], sizes = [8, 128], strides = [1, 1]} : vector<8x384xf32> to vector<8x128xf32>
    %297 = vector.broadcast %13 : vector<1x128xf32> to vector<8x128xf32>
    %298 = arith.addf %296, %297 : vector<8x128xf32>
    %299 = arith.mulf %286, %298 : vector<8x128xf32>
    %300 = arith.addf %295, %299 : vector<8x128xf32>
    %301 = math.tanh %300 : vector<8x128xf32>
    %cst_78 = arith.constant 1.000000e+00 : f32
    %302 = vector.broadcast %cst_78 : f32 to vector<8x128xf32>
    %303 = arith.subf %302, %294 : vector<8x128xf32>
    %304 = arith.mulf %303, %301 : vector<8x128xf32>
    %305 = arith.mulf %294, %269 : vector<8x128xf32>
    %306 = arith.addf %304, %305 : vector<8x128xf32>
    %307 = arith.truncf %306 : vector<8x128xf32> to vector<8x128xbf16>
    %308 = vector.shape_cast %307 : vector<8x128xbf16> to vector<8x1x128xbf16>
    %c0_79 = arith.constant 0 : index
    %309 = arith.index_cast %c7_i32 : i32 to index
    %c0_80 = arith.constant 0 : index
    %310 = vector.load %arg7[%c0_79, %309, %c0_80] : memref<8x8x128xbf16, #tpu.memory_space<vmem>>, vector<8x1x128xbf16>
    tpu.vector_store %arg7[%c0_79, %309, %c0_80], %308 {strides = array<i32>} : memref<8x8x128xbf16, #tpu.memory_space<vmem>>, vector<8x1x128xbf16>,
    %c8_i32 = arith.constant 8 : i32
    %c0_81 = arith.constant 0 : index
    %c0_82 = arith.constant 0 : index
    %311 = vector.load %arg8[%c0_81, %c0_82] : memref<8x128xf32, #tpu.memory_space<vmem>>, vector<8x128xf32>
    tpu.vector_store %arg8[%c0_81, %c0_82], %306 {strides = array<i32>} : memref<8x128xf32, #tpu.memory_space<vmem>>, vector<8x128xf32>,
    return
  }
  func.func @transform_0(%arg0: i32, %arg1: i32) -> (i32, i32, i32) {
    %c0_i32 = arith.constant 0 : i32
    %c0_i32_0 = arith.constant 0 : i32
    return %arg1, %arg0, %c0_i32 : i32, i32, i32
  }
  func.func @transform_1(%arg0: i32, %arg1: i32) -> (i32, i32) {
    %c0_i32 = arith.constant 0 : i32
    %c0_i32_0 = arith.constant 0 : i32
    %c0_i32_1 = arith.constant 0 : i32
    return %c0_i32, %c0_i32_0 : i32, i32
  }
  func.func @transform_2(%arg0: i32, %arg1: i32) -> (i32, i32) {
    %c0_i32 = arith.constant 0 : i32
    %c0_i32_0 = arith.constant 0 : i32
    %c0_i32_1 = arith.constant 0 : i32
    return %c0_i32, %c0_i32_0 : i32, i32
  }
  func.func @transform_3(%arg0: i32, %arg1: i32) -> (i32, i32) {
    %c0_i32 = arith.constant 0 : i32
    %c0_i32_0 = arith.constant 0 : i32
    %c0_i32_1 = arith.constant 0 : i32
    return %c0_i32, %c0_i32_0 : i32, i32
  }
  func.func @transform_4(%arg0: i32, %arg1: i32) -> (i32, i32) {
    %c0_i32 = arith.constant 0 : i32
    %c0_i32_0 = arith.constant 0 : i32
    %c0_i32_1 = arith.constant 0 : i32
    return %c0_i32, %c0_i32_0 : i32, i32
  }
  func.func @transform_5(%arg0: i32, %arg1: i32) -> (i32, i32, i32) {
    %c0_i32 = arith.constant 0 : i32
    %c0_i32_0 = arith.constant 0 : i32
    return %arg0, %arg1, %c0_i32 : i32, i32, i32
  }
}

</mosaic_0001>

<llo_original>
// kernel: tpu_custom_call.1
$region0: #{tpu_custom_call.1}
  #allocation0 [shape = 'u32[]', space=smem, size = 0x4, offset = 0x4, fixed_abs, tag = 'smem constant byte address 0x4 - core index']
  #allocation1 [shape = 'u32[72,128]{1,0:T(1,128)}', space=vmem, size = 0x9000, scoped, tag = 'internal scratch']
  #allocation2 [shape = 'f32[8,128]{1,0:T(8,128)}', space=vmem, size = 0x1000, scoped, tag = 'scratch operand']
  #allocation3 [shape = 'f32[8,8,384]{2,1,0:T(8,128)}', space=vmem, size = 0x18000, scoped, tag = 'scratch operand']
  %s0 = inlined_call_operand.hbm [shape: bf16[8,8,16], index: 0, kind: input, shape index: {}]
  %s1 = inlined_call_operand.hbm [shape: bf16[16,384], index: 1, kind: input, shape index: {}]
  %s2 = inlined_call_operand.hbm [shape: bf16[128,384], index: 2, kind: input, shape index: {}]
  %s3 = inlined_call_operand.hbm [shape: f32[1,384], index: 3, kind: input, shape index: {}]
  %s4 = inlined_call_operand.vmem [shape: f32[1,128], index: 4, kind: input, shape index: {}]
  %s5 = inlined_call_operand.hbm [shape: bf16[8,8,128], index: 5, kind: output, shape index: {}]
  %s6 = sld [smem:[#allocation0]]
  $region50: #{tpu_custom_call.1} parent=0
    _
  %s8 = ssub.s32 1, %s6
  %s9 = scalar_select 0, %s8, %s6
  $region1: #{tpu_custom_call.1} parent=0
    #allocation4 [shape = 'u8[16384]{0}', space=vmem, size = 0x4000, scoped, tag = 'input window, operand 0, single buffered']
    #allocation5 [shape = 's32[1]{0}', space=sflag, size = 0x4, scoped, tag = 'scoped memory for tpu_custom_call.1']
    #allocation6 [shape = 's32[1]{0}', space=sflag, size = 0x4, scoped, tag = 'scoped memory for tpu_custom_call.1']
    #allocation7 [shape = 'u8[12288]{0}', space=vmem, size = 0x3000, scoped, tag = 'input window, operand 1, single buffered']
    #allocation8 [shape = 's32[1]{0}', space=sflag, size = 0x4, scoped, tag = 'scoped memory for tpu_custom_call.1']
    #allocation9 [shape = 'u8[98304]{0}', space=vmem, size = 0x18000, scoped, tag = 'input window, operand 2, single buffered']
    #allocation10 [shape = 'u8[1536]{0}', space=vmem, size = 0x800, scoped, tag = 'input window, operand 3, single buffered']
    #allocation11 [shape = 's32[1]{0}', space=sflag, size = 0x4, scoped, tag = 'scoped memory for tpu_custom_call.1']
    #allocation12 [shape = 'u8[16384]{0}', space=vmem, size = 0x4000, scoped, tag = 'output window, operand 0, single buffered']
    %10 = vsyncpa [#allocation5], 0
    %11 = vsyncpa [#allocation8], 0
    %12 = vsyncpa [#allocation11], 0
    %13 = vsyncpa [#allocation6], 0
    // Predicated region
    $region2: #{tpu_custom_call.1} parent=1 // pred_check
      _
    $region3: #{tpu_custom_call.1} parent=1 // pred_check_branch
      %15 = sbr.rel (0) target = $region5
    $region4: #{tpu_custom_call.1} parent=1 // pred_region
      %17 = vsyncadd [#allocation5], 0
      %s18 = sshll.u32 %s0, 4
      %s19 = int_to_ptr.hbm [resolvable:$true] %s18
      %s20 = sshll.u32 [#allocation4], 4
      %s21 = int_to_ptr.vmem [resolvable:$true] %s20
      %26 = dma.hbm_to_vmem [thread:$0]  %s19, 512, %s21, [#allocation5], 64, 64, 4
    $region5: #{tpu_custom_call.1} parent=1 // pred_fallthru
      _
    // Predicated region
    $region6: #{tpu_custom_call.1} parent=1 // pred_check
      _
    $region7: #{tpu_custom_call.1} parent=1 // pred_check_branch
      %28 = sbr.rel (0) target = $region9
    $region8: #{tpu_custom_call.1} parent=1 // pred_region
      %30 = vsyncadd [#allocation8], 0
      %s31 = sshll.u32 %s1, 4
      %s32 = int_to_ptr.hbm [resolvable:$true] %s31
      %s33 = sshll.u32 [#allocation7], 4
      %s34 = int_to_ptr.vmem [resolvable:$true] %s33
      %39 = dma.hbm_to_vmem [thread:$0]  %s32, 384, %s34, [#allocation8], 192, 192, 12
    $region9: #{tpu_custom_call.1} parent=1 // pred_fallthru
      _
    // Predicated region
    $region10: #{tpu_custom_call.1} parent=1 // pred_check
      _
    $region11: #{tpu_custom_call.1} parent=1 // pred_check_branch
      %41 = sbr.rel (0) target = $region13
    $region12: #{tpu_custom_call.1} parent=1 // pred_region
      %43 = vsyncadd [#allocation8], 0
      %s44 = sshll.u32 %s2, 4
      %s45 = int_to_ptr.hbm [resolvable:$true] %s44
      %s46 = sshll.u32 [#allocation9], 4
      %s47 = int_to_ptr.vmem [resolvable:$true] %s46
      %52 = dma.hbm_to_vmem [thread:$0]  %s45, 3072, %s47, [#allocation8], 192, 192, 12
    $region13: #{tpu_custom_call.1} parent=1 // pred_fallthru
      _
    // Predicated region
    $region14: #{tpu_custom_call.1} parent=1 // pred_check
      _
    $region15: #{tpu_custom_call.1} parent=1 // pred_check_branch
      %54 = sbr.rel (0) target = $region17
    $region16: #{tpu_custom_call.1} parent=1 // pred_region
      %56 = vsyncadd [#allocation11], 0
      %s58 = sshll.u32 %s3, 4
      %s59 = int_to_ptr.hbm [resolvable:$true] %s58
      %s60 = sshll.u32 [#allocation10], 4
      %s61 = int_to_ptr.vmem [resolvable:$true] %s60
      %63 = dma.hbm_to_vmem [thread:$0]  %s59, 48, %s61, [#allocation11]
    $region17: #{tpu_custom_call.1} parent=1 // pred_fallthru
      _
    // Predicated region
    $region18: #{tpu_custom_call.1} parent=1 // pred_check
      _
    $region19: #{tpu_custom_call.1} parent=1 // pred_check_branch
      %65 = sbr.rel (0) target = $region21
    $region20: #{tpu_custom_call.1} parent=1 // pred_region
      _
    $region21: #{tpu_custom_call.1} parent=1 // pred_fallthru
      _
    // Predicated region
    $region22: #{tpu_custom_call.1} parent=1 // pred_check
      _
    $region23: #{tpu_custom_call.1} parent=1 // pred_check_branch
      %67 = sbr.rel (0) target = $region25
    $region24: #{tpu_custom_call.1} parent=1 // pred_region
      %69 = dma.done [#allocation5], 512
    $region25: #{tpu_custom_call.1} parent=1 // pred_fallthru
      _
    // Predicated region
    $region26: #{tpu_custom_call.1} parent=1 // pred_check
      _
    $region27: #{tpu_custom_call.1} parent=1 // pred_check_branch
      %71 = sbr.rel (0) target = $region29
    $region28: #{tpu_custom_call.1} parent=1 // pred_region
      %73 = dma.done [#allocation8], 384
    $region29: #{tpu_custom_call.1} parent=1 // pred_fallthru
      _
    // Predicated region
    $region30: #{tpu_custom_call.1} parent=1 // pred_check
      _
    $region31: #{tpu_custom_call.1} parent=1 // pred_check_branch
      %75 = sbr.rel (0) target = $region33
    $region32: #{tpu_custom_call.1} parent=1 // pred_region
      %77 = dma.done [#allocation8], 3072
    $region33: #{tpu_custom_call.1} parent=1 // pred_fallthru
      _
    // Predicated region
    $region34: #{tpu_custom_call.1} parent=1 // pred_check
      _
    $region35: #{tpu_custom_call.1} parent=1 // pred_check_branch
      %79 = sbr.rel (0) target = $region37
    $region36: #{tpu_custom_call.1} parent=1 // pred_region
      %81 = dma.done [#allocation11], 48
    $region37: #{tpu_custom_call.1} parent=1 // pred_fallthru
      _
    %p83 = scmp.eq.s32.totalorder 0, 0
    // Predicated region
    $region38: #{tpu_custom_call.1} parent=1 // pred_check
      %p84 = pneg %p83
    $region39: #{tpu_custom_call.1} parent=1 // pred_check_branch
      %86 = sbr.rel (%p84) target = $region41
    $region40: #{tpu_custom_call.1} parent=1 // pred_region
      %87 = vst [vmem:[#allocation2] sm:$0xff] 0.0
    $region41: #{tpu_custom_call.1} parent=1 // pred_fallthru
      _
    %v88 = vld [vmem:[#allocation4] sm:$0xf]
    %v89 = vld [vmem:[#allocation4 + $0x4] sm:$0xf]
    %v90 = vld [vmem:[#allocation4 + $0x8] sm:$0xf]
    %v91 = vld [vmem:[#allocation4 + $0xc] sm:$0xf]
    %v92 = vld [vmem:[#allocation4 + $0x10] sm:$0xf]
    %v93 = vld [vmem:[#allocation4 + $0x14] sm:$0xf]
    %v94 = vld [vmem:[#allocation4 + $0x18] sm:$0xf]
    %v95 = vld [vmem:[#allocation4 + $0x1c] sm:$0xf]
    %v96 = vld [vmem:[#allocation7] sm:$0xff]
    %v97 = vld [vmem:[#allocation7 + $0x8] sm:$0xf]
    %v98 = vld [vmem:[#allocation7 + $0xc] sm:$0xff]
    %v99 = vld [vmem:[#allocation7 + $0x14] sm:$0xf]
    %v100 = vld [vmem:[#allocation10] sm:$0x7]
    %v102 = vperm.slane %v100, 0
    %v103 = vperm.slane %v100, 1
    %v104 = vperm.slane %v100, 2
    %v116 = vunpack.c.l.b16 %v88
    %v117 = vunpack.c.l.b16 %v89
    %v118 = vunpack.c.l.b16 %v90
    %v119 = vunpack.c.l.b16 %v91
    %v120 = vunpack.c.l.b16 %v92
    %v121 = vunpack.c.l.b16 %v93
    %v122 = vunpack.c.l.b16 %v94
    %v123 = vunpack.c.l.b16 %v95
    %v124 = vpack.c.b16 %v117, %v116
    %v125 = vpack.c.b16 %v119, %v118
    %v126 = vpack.c.b16 %v121, %v120
    %v127 = vpack.c.b16 %v123, %v122
    %v132 = vunpack.c.l.b16 %v96
    %v133 = vunpack.c.h.b16 %v96
    %v134 = vunpack.c.l.b16 %v97
    %v135 = vunpack.c.l.b16 %v98
    %v136 = vunpack.c.h.b16 %v98
    %v137 = vunpack.c.l.b16 %v99
    %v138 = vpack.c.b16 %v135, %v132
    %v139 = vpack.c.b16 %v136, %v133
    %v140 = vpack.c.b16 %v137, %v134
    %vm144 = vcmask 130048
    %v146 = vsel %vm144, %v124, 0
    %v149 = vsel %vm144, %v125, 0
    %v152 = vsel %vm144, %v126, 0
    %v155 = vsel %vm144, %v127, 0
    %157 = vmatpush.bf16.msra.mxu0 0
    %158 = vmatpush.bf16.msra.mxu0 0
    %159 = vmatpush.bf16.msra.mxu0 0
    %160 = vmatpush.bf16.msra.mxu0 0
    %161 = vmatpush.bf16.msra.mxu0 0
    %162 = vmatpush.bf16.msra.mxu0 0
    %163 = vmatpush.bf16.msra.mxu0 0
    %164 = vmatpush.bf16.msra.mxu0 %v138
    %165 = vmatmul.bf16.gmra.mxu0 %v146
    %v166 = vpop.f32.mrf.mxu0
    %v167 = vadd.f32 %v102, %v166
    %v168 = vpop.f32.mrf.mxu0
    %v169 = vadd.f32 %v102, %v168
    %170 = vmatmul.bf16.gmra.mxu0 %v149
    %v171 = vpop.f32.mrf.mxu0
    %v172 = vadd.f32 %v102, %v171
    %v173 = vpop.f32.mrf.mxu0
    %v174 = vadd.f32 %v102, %v173
    %175 = vmatmul.bf16.gmra.mxu0 %v152
    %v176 = vpop.f32.mrf.mxu0
    %v177 = vadd.f32 %v102, %v176
    %v178 = vpop.f32.mrf.mxu0
    %v179 = vadd.f32 %v102, %v178
    %180 = vmatmul.bf16.gmra.mxu0 %v155
    %v181 = vpop.f32.mrf.mxu0
    %v182 = vadd.f32 %v102, %v181
    %v183 = vpop.f32.mrf.mxu0
    %v184 = vadd.f32 %v102, %v183
    %185 = vdwg.mxu0
    %186 = vmatpush.bf16.msra.mxu0 0
    %187 = vmatpush.bf16.msra.mxu0 0
    %188 = vmatpush.bf16.msra.mxu0 0
    %189 = vmatpush.bf16.msra.mxu0 0
    %190 = vmatpush.bf16.msra.mxu0 0
    %191 = vmatpush.bf16.msra.mxu0 0
    %192 = vmatpush.bf16.msra.mxu0 0
    %193 = vmatpush.bf16.msra.mxu0 %v139
    %194 = vmatmul.bf16.gmra.mxu0 %v146
    %v195 = vpop.f32.mrf.mxu0
    %v196 = vadd.f32 %v103, %v195
    %v197 = vpop.f32.mrf.mxu0
    %v198 = vadd.f32 %v103, %v197
    %199 = vmatmul.bf16.gmra.mxu0 %v149
    %v200 = vpop.f32.mrf.mxu0
    %v201 = vadd.f32 %v103, %v200
    %v202 = vpop.f32.mrf.mxu0
    %v203 = vadd.f32 %v103, %v202
    %204 = vmatmul.bf16.gmra.mxu0 %v152
    %v205 = vpop.f32.mrf.mxu0
    %v206 = vadd.f32 %v103, %v205
    %v207 = vpop.f32.mrf.mxu0
    %v208 = vadd.f32 %v103, %v207
    %209 = vmatmul.bf16.gmra.mxu0 %v155
    %v210 = vpop.f32.mrf.mxu0
    %v211 = vadd.f32 %v103, %v210
    %v212 = vpop.f32.mrf.mxu0
    %v213 = vadd.f32 %v103, %v212
    %214 = vdwg.mxu0
    %215 = vmatpush.bf16.msra.mxu0 0
    %216 = vmatpush.bf16.msra.mxu0 0
    %217 = vmatpush.bf16.msra.mxu0 0
    %218 = vmatpush.bf16.msra.mxu0 0
    %219 = vmatpush.bf16.msra.mxu0 0
    %220 = vmatpush.bf16.msra.mxu0 0
    %221 = vmatpush.bf16.msra.mxu0 0
    %222 = vmatpush.bf16.msra.mxu0 %v140
    %223 = vmatmul.bf16.gmra.mxu0 %v146
    %v224 = vpop.f32.mrf.mxu0
    %v225 = vadd.f32 %v104, %v224
    %v226 = vpop.f32.mrf.mxu0
    %v227 = vadd.f32 %v104, %v226
    %228 = vmatmul.bf16.gmra.mxu0 %v149
    %v229 = vpop.f32.mrf.mxu0
    %v230 = vadd.f32 %v104, %v229
    %v231 = vpop.f32.mrf.mxu0
    %v232 = vadd.f32 %v104, %v231
    %233 = vmatmul.bf16.gmra.mxu0 %v152
    %v234 = vpop.f32.mrf.mxu0
    %v235 = vadd.f32 %v104, %v234
    %v236 = vpop.f32.mrf.mxu0
    %v237 = vadd.f32 %v104, %v236
    %238 = vmatmul.bf16.gmra.mxu0 %v155
    %v239 = vpop.f32.mrf.mxu0
    %v240 = vadd.f32 %v104, %v239
    %v241 = vpop.f32.mrf.mxu0
    %v242 = vadd.f32 %v104, %v241
    %243 = vdwg.mxu0
    %244 = vst [vmem:[#allocation3] sm:$0xff] %v167
    %245 = vst [vmem:[#allocation3 + $0x8] sm:$0xff] %v196
    %246 = vst [vmem:[#allocation3 + $0x10] sm:$0xff] %v225
    %247 = vst [vmem:[#allocation3 + $0x18] sm:$0xff] %v169
    %248 = vst [vmem:[#allocation3 + $0x20] sm:$0xff] %v198
    %249 = vst [vmem:[#allocation3 + $0x28] sm:$0xff] %v227
    %250 = vst [vmem:[#allocation3 + $0x30] sm:$0xff] %v172
    %251 = vst [vmem:[#allocation3 + $0x38] sm:$0xff] %v201
    %252 = vst [vmem:[#allocation3 + $0x40] sm:$0xff] %v230
    %253 = vst [vmem:[#allocation3 + $0x48] sm:$0xff] %v174
    %254 = vst [vmem:[#allocation3 + $0x50] sm:$0xff] %v203
    %255 = vst [vmem:[#allocation3 + $0x58] sm:$0xff] %v232
    %256 = vst [vmem:[#allocation3 + $0x60] sm:$0xff] %v177
    %257 = vst [vmem:[#allocation3 + $0x68] sm:$0xff] %v206
    %258 = vst [vmem:[#allocation3 + $0x70] sm:$0xff] %v235
    %259 = vst [vmem:[#allocation3 + $0x78] sm:$0xff] %v179
    %260 = vst [vmem:[#allocation3 + $0x80] sm:$0xff] %v208
    %261 = vst [vmem:[#allocation3 + $0x88] sm:$0xff] %v237
    %262 = vst [vmem:[#allocation3 + $0x90] sm:$0xff] %v182
    %263 = vst [vmem:[#allocation3 + $0x98] sm:$0xff] %v211
    %264 = vst [vmem:[#allocation3 + $0xa0] sm:$0xff] %v240
    %265 = vst [vmem:[#allocation3 + $0xa8] sm:$0xff] %v184
    %266 = vst [vmem:[#allocation3 + $0xb0] sm:$0xff] %v213
    %267 = vst [vmem:[#allocation3 + $0xb8] sm:$0xff] %v242
    %v268 = vld [vmem:[#allocation9] sm:$0xff]
    %v269 = vld [vmem:[#allocation9 + $0x8] sm:$0xf]
    %v270 = vld [vmem:[#allocation9 + $0xc] sm:$0xff]
    %v271 = vld [vmem:[#allocation9 + $0x14] sm:$0xf]
    %v272 = vld [vmem:[#allocation9 + $0x18] sm:$0xff]
    %v273 = vld [vmem:[#allocation9 + $0x20] sm:$0xf]
    %v274 = vld [vmem:[#allocation9 + $0x24] sm:$0xff]
    %v275 = vld [vmem:[#allocation9 + $0x2c] sm:$0xf]
    %v276 = vld [vmem:[#allocation9 + $0x30] sm:$0xff]
    %v277 = vld [vmem:[#allocation9 + $0x38] sm:$0xf]
    %v278 = vld [vmem:[#allocation9 + $0x3c] sm:$0xff]
    %v279 = vld [vmem:[#allocation9 + $0x44] sm:$0xf]
    %v280 = vld [vmem:[#allocation9 + $0x48] sm:$0xff]
    %v281 = vld [vmem:[#allocation9 + $0x50] sm:$0xf]
    %v282 = vld [vmem:[#allocation9 + $0x54] sm:$0xff]
    %v283 = vld [vmem:[#allocation9 + $0x5c] sm:$0xf]
    %v284 = vld [vmem:[#allocation9 + $0x60] sm:$0xff]
    %v285 = vld [vmem:[#allocation9 + $0x68] sm:$0xf]
    %v286 = vld [vmem:[#allocation9 + $0x6c] sm:$0xff]
    %v287 = vld [vmem:[#allocation9 + $0x74] sm:$0xf]
    %v288 = vld [vmem:[#allocation9 + $0x78] sm:$0xff]
    %v289 = vld [vmem:[#allocation9 + $0x80] sm:$0xf]
    %v290 = vld [vmem:[#allocation9 + $0x84] sm:$0xff]
    %v291 = vld [vmem:[#allocation9 + $0x8c] sm:$0xf]
    %v292 = vld [vmem:[#allocation9 + $0x90] sm:$0xff]
    %v293 = vld [vmem:[#allocation9 + $0x98] sm:$0xf]
    %v294 = vld [vmem:[#allocation9 + $0x9c] sm:$0xff]
    %v295 = vld [vmem:[#allocation9 + $0xa4] sm:$0xf]
    %v296 = vld [vmem:[#allocation9 + $0xa8] sm:$0xff]
    %v297 = vld [vmem:[#allocation9 + $0xb0] sm:$0xf]
    %v298 = vld [vmem:[#allocation9 + $0xb4] sm:$0xff]
    %v299 = vld [vmem:[#allocation9 + $0xbc] sm:$0xf]
    %v300 = vld [vmem:[%s4] sm:$0x1]
    %v301 = vld [vmem:[#allocation2] sm:$0xff]
    %v302 = vld [vmem:[#allocation3] sm:$0xff]
    %v303 = vld [vmem:[#allocation3 + $0x8] sm:$0xff]
    %v304 = vld [vmem:[#allocation3 + $0x10] sm:$0xff]
    %v305 = vpack.c.bf16 %v301, %v301
    %v338 = vunpack.c.l.b16 %v268
    %v339 = vunpack.c.h.b16 %v268
    %v340 = vunpack.c.l.b16 %v269
    %v341 = vunpack.c.l.b16 %v270
    %v342 = vunpack.c.h.b16 %v270
    %v343 = vunpack.c.l.b16 %v271
    %v344 = vunpack.c.l.b16 %v272
    %v345 = vunpack.c.h.b16 %v272
    %v346 = vunpack.c.l.b16 %v273
    %v347 = vunpack.c.l.b16 %v274
    %v348 = vunpack.c.h.b16 %v274
    %v349 = vunpack.c.l.b16 %v275
    %v350 = vunpack.c.l.b16 %v276
    %v351 = vunpack.c.h.b16 %v276
    %v352 = vunpack.c.l.b16 %v277
    %v353 = vunpack.c.l.b16 %v278
    %v354 = vunpack.c.h.b16 %v278
    %v355 = vunpack.c.l.b16 %v279
    %v356 = vunpack.c.l.b16 %v280
    %v357 = vunpack.c.h.b16 %v280
    %v358 = vunpack.c.l.b16 %v281
    %v359 = vunpack.c.l.b16 %v282
    %v360 = vunpack.c.h.b16 %v282
    %v361 = vunpack.c.l.b16 %v283
    %v362 = vunpack.c.l.b16 %v284
    %v363 = vunpack.c.h.b16 %v284
    %v364 = vunpack.c.l.b16 %v285
    %v365 = vunpack.c.l.b16 %v286
    %v366 = vunpack.c.h.b16 %v286
    %v367 = vunpack.c.l.b16 %v287
    %v368 = vunpack.c.l.b16 %v288
    %v369 = vunpack.c.h.b16 %v288
    %v370 = vunpack.c.l.b16 %v289
    %v371 = vunpack.c.l.b16 %v290
    %v372 = vunpack.c.h.b16 %v290
    %v373 = vunpack.c.l.b16 %v291
    %v374 = vunpack.c.l.b16 %v292
    %v375 = vunpack.c.h.b16 %v292
    %v376 = vunpack.c.l.b16 %v293
    %v377 = vunpack.c.l.b16 %v294
    %v378 = vunpack.c.h.b16 %v294
    %v379 = vunpack.c.l.b16 %v295
    %v380 = vunpack.c.l.b16 %v296
    %v381 = vunpack.c.h.b16 %v296
    %v382 = vunpack.c.l.b16 %v297
    %v383 = vunpack.c.l.b16 %v298
    %v384 = vunpack.c.h.b16 %v298
    %v385 = vunpack.c.l.b16 %v299
    %v386 = vpack.c.b16 %v341, %v338
    %v387 = vpack.c.b16 %v342, %v339
    %v388 = vpack.c.b16 %v343, %v340
    %v389 = vpack.c.b16 %v347, %v344
    %v390 = vpack.c.b16 %v348, %v345
    %v391 = vpack.c.b16 %v349, %v346
    %v392 = vpack.c.b16 %v353, %v350
    %v393 = vpack.c.b16 %v354, %v351
    %v394 = vpack.c.b16 %v355, %v352
    %v395 = vpack.c.b16 %v359, %v356
    %v396 = vpack.c.b16 %v360, %v357
    %v397 = vpack.c.b16 %v361, %v358
    %v398 = vpack.c.b16 %v365, %v362
    %v399 = vpack.c.b16 %v366, %v363
    %v400 = vpack.c.b16 %v367, %v364
    %v401 = vpack.c.b16 %v371, %v368
    %v402 = vpack.c.b16 %v372, %v369
    %v403 = vpack.c.b16 %v373, %v370
    %v404 = vpack.c.b16 %v377, %v374
    %v405 = vpack.c.b16 %v378, %v375
    %v406 = vpack.c.b16 %v379, %v376
    %v407 = vpack.c.b16 %v383, %v380
    %v408 = vpack.c.b16 %v384, %v381
    %v409 = vpack.c.b16 %v385, %v382
    %434 = vmatpush.bf16.msra.mxu0 %v407
    %435 = vmatpush.bf16.msra.mxu0 %v404
    %436 = vmatpush.bf16.msra.mxu0 %v401
    %437 = vmatpush.bf16.msra.mxu0 %v398
    %438 = vmatpush.bf16.msra.mxu0 %v395
    %439 = vmatpush.bf16.msra.mxu0 %v392
    %440 = vmatpush.bf16.msra.mxu0 %v389
    %441 = vmatpush.bf16.msra.mxu0 %v386
    %442 = vmatmul.bf16.gmra.mxu0 %v305
    %v443 = vpop.f32.mrf.mxu0
    %v444 = vadd.f32 0.0, %v443
    %v445 = vpop.f32.mrf.mxu0
    %446 = vdwg.mxu0
    %447 = vmatpush.bf16.msra.mxu0 %v408
    %448 = vmatpush.bf16.msra.mxu0 %v405
    %449 = vmatpush.bf16.msra.mxu0 %v402
    %450 = vmatpush.bf16.msra.mxu0 %v399
    %451 = vmatpush.bf16.msra.mxu0 %v396
    %452 = vmatpush.bf16.msra.mxu0 %v393
    %453 = vmatpush.bf16.msra.mxu0 %v390
    %454 = vmatpush.bf16.msra.mxu0 %v387
    %455 = vmatmul.bf16.gmra.mxu0 %v305
    %v456 = vpop.f32.mrf.mxu0
    %v457 = vadd.f32 0.0, %v456
    %v458 = vpop.f32.mrf.mxu0
    %459 = vdwg.mxu0
    %460 = vmatpush.bf16.msra.mxu0 %v409
    %461 = vmatpush.bf16.msra.mxu0 %v406
    %462 = vmatpush.bf16.msra.mxu0 %v403
    %463 = vmatpush.bf16.msra.mxu0 %v400
    %464 = vmatpush.bf16.msra.mxu0 %v397
    %465 = vmatpush.bf16.msra.mxu0 %v394
    %466 = vmatpush.bf16.msra.mxu0 %v391
    %467 = vmatpush.bf16.msra.mxu0 %v388
    %468 = vmatmul.bf16.gmra.mxu0 %v305
    %v469 = vpop.f32.mrf.mxu0
    %v470 = vadd.f32 0.0, %v469
    %v471 = vpop.f32.mrf.mxu0
    %472 = vdwg.mxu0
    %v473 = vadd.f32 %v302, %v444
    %v474 = vxor.u32 %v473, 2147483648
    %v475 = vmul.f32 %v474, 1.442695
    %v476 = vpow.pop %v475
    %v477 = vadd.f32 %v476, 1.0
    %v478 = vrcp.pop %v477
    %v479 = vmul.f32 %v477, %v478
    %v480 = vsub.f32 1.0, %v479
    %v481 = vmul.f32 %v478, %v480
    %v482 = vadd.f32 %v478, %v481
    %vm483 = vweird.f32 %v477
    %vm484 = vweird.f32 %v478
    %vm485 = vmor %vm483, %vm484
    %v486 = vsel %vm485, %v478, %v482
    %v487 = vand.u32 2147483647, %v477
    %vm488 = vcmp.eq.f32.partialorder %v487, 8.507059e+37
    %v489 = vand.u32 %v477, 2147483648
    %v490 = vor.u32 1.1754944e-38, %v489
    %v491 = vsel %vm488, %v490, %v486
    %v492 = vmul.f32 1.0, %v491
    %v493 = vadd.f32 %v303, %v457
    %v494 = vxor.u32 %v493, 2147483648
    %v495 = vmul.f32 %v494, 1.442695
    %v496 = vpow.pop %v495
    %v497 = vadd.f32 %v496, 1.0
    %v498 = vrcp.pop %v497
    %v499 = vmul.f32 %v497, %v498
    %v500 = vsub.f32 1.0, %v499
    %v501 = vmul.f32 %v498, %v500
    %v502 = vadd.f32 %v498, %v501
    %vm503 = vweird.f32 %v497
    %vm504 = vweird.f32 %v498
    %vm505 = vmor %vm503, %vm504
    %v506 = vsel %vm505, %v498, %v502
    %v507 = vand.u32 2147483647, %v497
    %vm508 = vcmp.eq.f32.partialorder %v507, 8.507059e+37
    %v509 = vand.u32 %v497, 2147483648
    %v510 = vor.u32 1.1754944e-38, %v509
    %v511 = vsel %vm508, %v510, %v506
    %v512 = vmul.f32 1.0, %v511
    %v514 = vperm.slane %v300, 0
    %v516 = vadd.f32 %v470, %v514
    %v517 = vmul.f32 %v492, %v516
    %v518 = vadd.f32 %v304, %v517
    %v519 = vtanh.pop %v518
    %v520 = vsub.f32 1.0, %v512
    %v521 = vmul.f32 %v520, %v519
    %v522 = vmul.f32 %v512, %v301
    %v523 = vadd.f32 %v521, %v522
    %v524 = vpack.c.bf16 %v523, %v523
    %v526 = vrot.slane %v524, 3
    %vm527 = vcmask 1040384
    %v530 = vsel %vm527, %v524, %v526
    %vm532 = vcmask 1041409
    %v533 = vsel %vm532, %v524, %v526
    %v535 = vrot.slane %v533, 1
    %vm536 = vcmask 1042434
    %v537 = vsel %vm536, %v524, %v526
    %v539 = vrot.slane %v537, 2
    %vm540 = vcmask 1043459
    %v541 = vsel %vm540, %v524, %v526
    %v543 = vrot.slane %v541, 3
    %v544 = vunpack.i.l.s16 %v530
    %v545 = vunpack.i.h.s16 %v530
    %v546 = vunpack.i.l.s16 %v535
    %v547 = vunpack.i.h.s16 %v535
    %v548 = vunpack.i.l.s16 %v539
    %v549 = vunpack.i.h.s16 %v539
    %v550 = vunpack.i.l.s16 %v543
    %v551 = vunpack.i.h.s16 %v543
    %v552 = vpack.i.b16 %v544, %v544
    %v553 = vpack.i.b16 %v545, %v545
    %v554 = vpack.i.b16 %v546, %v546
    %v555 = vpack.i.b16 %v547, %v547
    %v556 = vpack.i.b16 %v548, %v548
    %v557 = vpack.i.b16 %v549, %v549
    %v558 = vpack.i.b16 %v550, %v550
    %v559 = vpack.i.b16 %v551, %v551
    %v561 = vunpack.c.l.s4 286326784
    %v562 = vunpack.c.0.s8 %v561
    %v563 = vperm.slane %v552, %v562
    %v565 = vunpack.c.l.s4 286326784
    %v566 = vunpack.c.0.s8 %v565
    %v567 = vperm.slane %v553, %v566
    %v569 = vunpack.c.l.s4 286326784
    %v570 = vunpack.c.0.s8 %v569
    %v571 = vperm.slane %v554, %v570
    %v573 = vunpack.c.l.s4 286326784
    %v574 = vunpack.c.0.s8 %v573
    %v575 = vperm.slane %v555, %v574
    %v577 = vunpack.c.l.s4 286326784
    %v578 = vunpack.c.0.s8 %v577
    %v579 = vperm.slane %v556, %v578
    %v581 = vunpack.c.l.s4 286326784
    %v582 = vunpack.c.0.s8 %v581
    %v583 = vperm.slane %v557, %v582
    %v585 = vunpack.c.l.s4 286326784
    %v586 = vunpack.c.0.s8 %v585
    %v587 = vperm.slane %v558, %v586
    %v589 = vunpack.c.l.s4 286326784
    %v590 = vunpack.c.0.s8 %v589
    %v591 = vperm.slane %v559, %v590
    %vm600 = vcmask 1040384
    %vm601 = vsmask.f32 256
    %vm602 = vmand %vm600, %vm601
    %v603 = vld [vmem:[#allocation12] sm:$0x1]
    %v604 = vsel %vm602, %v563, %v603
    %605 = vst [vmem:[#allocation12] sm:$0x1] %v604
    %v606 = vld [vmem:[#allocation12 + $0x4] sm:$0x1]
    %v607 = vsel %vm602, %v567, %v606
    %608 = vst [vmem:[#allocation12 + $0x4] sm:$0x1] %v607
    %v609 = vld [vmem:[#allocation12 + $0x8] sm:$0x1]
    %v610 = vsel %vm602, %v571, %v609
    %611 = vst [vmem:[#allocation12 + $0x8] sm:$0x1] %v610
    %v612 = vld [vmem:[#allocation12 + $0xc] sm:$0x1]
    %v613 = vsel %vm602, %v575, %v612
    %614 = vst [vmem:[#allocation12 + $0xc] sm:$0x1] %v613
    %v615 = vld [vmem:[#allocation12 + $0x10] sm:$0x1]
    %v616 = vsel %vm602, %v579, %v615
    %617 = vst [vmem:[#allocation12 + $0x10] sm:$0x1] %v616
    %v618 = vld [vmem:[#allocation12 + $0x14] sm:$0x1]
    %v619 = vsel %vm602, %v583, %v618
    %620 = vst [vmem:[#allocation12 + $0x14] sm:$0x1] %v619
    %v621 = vld [vmem:[#allocation12 + $0x18] sm:$0x1]
    %v622 = vsel %vm602, %v587, %v621
    %623 = vst [vmem:[#allocation12 + $0x18] sm:$0x1] %v622
    %v624 = vld [vmem:[#allocation12 + $0x1c] sm:$0x1]
    %v625 = vsel %vm602, %v591, %v624
    %626 = vst [vmem:[#allocation12 + $0x1c] sm:$0x1] %v625
    %s627 = scalar_lea.vmem [#allocation3], 24
    %v628 = vld [vmem:[%s627] sm:$0xff]
    %v629 = vld [vmem:[%s627 + $0x8] sm:$0xff]
    %v630 = vld [vmem:[%s627 + $0x10] sm:$0xff]
    %631 = vmatpush.bf16.msra.mxu0 %v407
    %632 = vmatpush.bf16.msra.mxu0 %v404
    %633 = vmatpush.bf16.msra.mxu0 %v401
    %634 = vmatpush.bf16.msra.mxu0 %v398
    %635 = vmatpush.bf16.msra.mxu0 %v395
    %636 = vmatpush.bf16.msra.mxu0 %v392
    %637 = vmatpush.bf16.msra.mxu0 %v389
    %638 = vmatpush.bf16.msra.mxu0 %v386
    %639 = vmatmul.bf16.gmra.mxu0 %v524
    %v640 = vpop.f32.mrf.mxu0
    %v641 = vadd.f32 0.0, %v640
    %v642 = vpop.f32.mrf.mxu0
    %643 = vdwg.mxu0
    %644 = vmatpush.bf16.msra.mxu0 %v408
    %645 = vmatpush.bf16.msra.mxu0 %v405
    %646 = vmatpush.bf16.msra.mxu0 %v402
    %647 = vmatpush.bf16.msra.mxu0 %v399
    %648 = vmatpush.bf16.msra.mxu0 %v396
    %649 = vmatpush.bf16.msra.mxu0 %v393
    %650 = vmatpush.bf16.msra.mxu0 %v390
    %651 = vmatpush.bf16.msra.mxu0 %v387
    %652 = vmatmul.bf16.gmra.mxu0 %v524
    %v653 = vpop.f32.mrf.mxu0
    %v654 = vadd.f32 0.0, %v653
    %v655 = vpop.f32.mrf.mxu0
    %656 = vdwg.mxu0
    %657 = vmatpush.bf16.msra.mxu0 %v409
    %658 = vmatpush.bf16.msra.mxu0 %v406
    %659 = vmatpush.bf16.msra.mxu0 %v403
    %660 = vmatpush.bf16.msra.mxu0 %v400
    %661 = vmatpush.bf16.msra.mxu0 %v397
    %662 = vmatpush.bf16.msra.mxu0 %v394
    %663 = vmatpush.bf16.msra.mxu0 %v391
    %664 = vmatpush.bf16.msra.mxu0 %v388
    %665 = vmatmul.bf16.gmra.mxu0 %v524
    %v666 = vpop.f32.mrf.mxu0
    %v667 = vadd.f32 0.0, %v666
    %v668 = vpop.f32.mrf.mxu0
    %669 = vdwg.mxu0
    %v670 = vadd.f32 %v628, %v641
    %v671 = vxor.u32 %v670, 2147483648
    %v672 = vmul.f32 %v671, 1.442695
    %v673 = vpow.pop %v672
    %v674 = vadd.f32 %v673, 1.0
    %v675 = vrcp.pop %v674
    %v676 = vmul.f32 %v674, %v675
    %v677 = vsub.f32 1.0, %v676
    %v678 = vmul.f32 %v675, %v677
    %v679 = vadd.f32 %v675, %v678
    %vm680 = vweird.f32 %v674
    %vm681 = vweird.f32 %v675
    %vm682 = vmor %vm680, %vm681
    %v683 = vsel %vm682, %v675, %v679
    %v684 = vand.u32 2147483647, %v674
    %vm685 = vcmp.eq.f32.partialorder %v684, 8.507059e+37
    %v686 = vand.u32 %v674, 2147483648
    %v687 = vor.u32 1.1754944e-38, %v686
    %v688 = vsel %vm685, %v687, %v683
    %v689 = vmul.f32 1.0, %v688
    %v690 = vadd.f32 %v629, %v654
    %v691 = vxor.u32 %v690, 2147483648
    %v692 = vmul.f32 %v691, 1.442695
    %v693 = vpow.pop %v692
    %v694 = vadd.f32 %v693, 1.0
    %v695 = vrcp.pop %v694
    %v696 = vmul.f32 %v694, %v695
    %v697 = vsub.f32 1.0, %v696
    %v698 = vmul.f32 %v695, %v697
    %v699 = vadd.f32 %v695, %v698
    %vm700 = vweird.f32 %v694
    %vm701 = vweird.f32 %v695
    %vm702 = vmor %vm700, %vm701
    %v703 = vsel %vm702, %v695, %v699
    %v704 = vand.u32 2147483647, %v694
    %vm705 = vcmp.eq.f32.partialorder %v704, 8.507059e+37
    %v706 = vand.u32 %v694, 2147483648
    %v707 = vor.u32 1.1754944e-38, %v706
    %v708 = vsel %vm705, %v707, %v703
    %v709 = vmul.f32 1.0, %v708
    %v710 = vadd.f32 %v667, %v514
    %v711 = vmul.f32 %v689, %v710
    %v712 = vadd.f32 %v630, %v711
    %v713 = vtanh.pop %v712
    %v714 = vsub.f32 1.0, %v709
    %v715 = vmul.f32 %v714, %v713
    %v716 = vmul.f32 %v709, %v523
    %v717 = vadd.f32 %v715, %v716
    %v718 = vpack.c.bf16 %v717, %v717
    %v720 = vrot.slane %v718, 3
    %v723 = vsel %vm527, %v718, %v720
    %v725 = vsel %vm532, %v718, %v720
    %v727 = vrot.slane %v725, 1
    %v728 = vsel %vm536, %v718, %v720
    %v730 = vrot.slane %v728, 2
    %v731 = vsel %vm540, %v718, %v720
    %v733 = vrot.slane %v731, 3
    %v734 = vunpack.i.l.s16 %v723
    %v735 = vunpack.i.h.s16 %v723
    %v736 = vunpack.i.l.s16 %v727
    %v737 = vunpack.i.h.s16 %v727
    %v738 = vunpack.i.l.s16 %v730
    %v739 = vunpack.i.h.s16 %v730
    %v740 = vunpack.i.l.s16 %v733
    %v741 = vunpack.i.h.s16 %v733
    %v742 = vpack.i.b16 %v734, %v734
    %v743 = vpack.i.b16 %v735, %v735
    %v744 = vpack.i.b16 %v736, %v736
    %v745 = vpack.i.b16 %v737, %v737
    %v746 = vpack.i.b16 %v738, %v738
    %v747 = vpack.i.b16 %v739, %v739
    %v748 = vpack.i.b16 %v740, %v740
    %v749 = vpack.i.b16 %v741, %v741
    %v751 = vunpack.c.l.s4 286326784
    %v752 = vunpack.c.0.s8 %v751
    %v753 = vperm.slane %v742, %v752
    %v755 = vunpack.c.l.s4 286326784
    %v756 = vunpack.c.0.s8 %v755
    %v757 = vperm.slane %v743, %v756
    %v759 = vunpack.c.l.s4 286326784
    %v760 = vunpack.c.0.s8 %v759
    %v761 = vperm.slane %v744, %v760
    %v763 = vunpack.c.l.s4 286326784
    %v764 = vunpack.c.0.s8 %v763
    %v765 = vperm.slane %v745, %v764
    %v767 = vunpack.c.l.s4 286326784
    %v768 = vunpack.c.0.s8 %v767
    %v769 = vperm.slane %v746, %v768
    %v771 = vunpack.c.l.s4 286326784
    %v772 = vunpack.c.0.s8 %v771
    %v773 = vperm.slane %v747, %v772
    %v775 = vunpack.c.l.s4 286326784
    %v776 = vunpack.c.0.s8 %v775
    %v777 = vperm.slane %v748, %v776
    %v779 = vunpack.c.l.s4 286326784
    %v780 = vunpack.c.0.s8 %v779
    %v781 = vperm.slane %v749, %v780
    %vm790 = vsmask.f32 7938
    %vm791 = vmand %vm600, %vm790
    %v792 = vld [vmem:[#allocation12] sm:$0x1]
    %v793 = vsel %vm791, %v753, %v792
    %794 = vst [vmem:[#allocation12] sm:$0x1] %v793
    %v795 = vld [vmem:[#allocation12 + $0x4] sm:$0x1]
    %v796 = vsel %vm791, %v757, %v795
    %797 = vst [vmem:[#allocation12 + $0x4] sm:$0x1] %v796
    %v798 = vld [vmem:[#allocation12 + $0x8] sm:$0x1]
    %v799 = vsel %vm791, %v761, %v798
    %800 = vst [vmem:[#allocation12 + $0x8] sm:$0x1] %v799
    %v801 = vld [vmem:[#allocation12 + $0xc] sm:$0x1]
    %v802 = vsel %vm791, %v765, %v801
    %803 = vst [vmem:[#allocation12 + $0xc] sm:$0x1] %v802
    %v804 = vld [vmem:[#allocation12 + $0x10] sm:$0x1]
    %v805 = vsel %vm791, %v769, %v804
    %806 = vst [vmem:[#allocation12 + $0x10] sm:$0x1] %v805
    %v807 = vld [vmem:[#allocation12 + $0x14] sm:$0x1]
    %v808 = vsel %vm791, %v773, %v807
    %809 = vst [vmem:[#allocation12 + $0x14] sm:$0x1] %v808
    %v810 = vld [vmem:[#allocation12 + $0x18] sm:$0x1]
    %v811 = vsel %vm791, %v777, %v810
    %812 = vst [vmem:[#allocation12 + $0x18] sm:$0x1] %v811
    %v813 = vld [vmem:[#allocation12 + $0x1c] sm:$0x1]
    %v814 = vsel %vm791, %v781, %v813
    %815 = vst [vmem:[#allocation12 + $0x1c] sm:$0x1] %v814
    %s816 = scalar_lea.vmem [#allocation3], 48
    %v817 = vld [vmem:[%s816] sm:$0xff]
    %v818 = vld [vmem:[%s816 + $0x8] sm:$0xff]
    %v819 = vld [vmem:[%s816 + $0x10] sm:$0xff]
    %820 = vmatpush.bf16.msra.mxu0 %v407
    %821 = vmatpush.bf16.msra.mxu0 %v404
    %822 = vmatpush.bf16.msra.mxu0 %v401
    %823 = vmatpush.bf16.msra.mxu0 %v398
    %824 = vmatpush.bf16.msra.mxu0 %v395
    %825 = vmatpush.bf16.msra.mxu0 %v392
    %826 = vmatpush.bf16.msra.mxu0 %v389
    %827 = vmatpush.bf16.msra.mxu0 %v386
    %828 = vmatmul.bf16.gmra.mxu0 %v718
    %v829 = vpop.f32.mrf.mxu0
    %v830 = vadd.f32 0.0, %v829
    %v831 = vpop.f32.mrf.mxu0
    %832 = vdwg.mxu0
    %833 = vmatpush.bf16.msra.mxu0 %v408
    %834 = vmatpush.bf16.msra.mxu0 %v405
    %835 = vmatpush.bf16.msra.mxu0 %v402
    %836 = vmatpush.bf16.msra.mxu0 %v399
    %837 = vmatpush.bf16.msra.mxu0 %v396
    %838 = vmatpush.bf16.msra.mxu0 %v393
    %839 = vmatpush.bf16.msra.mxu0 %v390
    %840 = vmatpush.bf16.msra.mxu0 %v387
    %841 = vmatmul.bf16.gmra.mxu0 %v718
    %v842 = vpop.f32.mrf.mxu0
    %v843 = vadd.f32 0.0, %v842
    %v844 = vpop.f32.mrf.mxu0
    %845 = vdwg.mxu0
    %846 = vmatpush.bf16.msra.mxu0 %v409
    %847 = vmatpush.bf16.msra.mxu0 %v406
    %848 = vmatpush.bf16.msra.mxu0 %v403
    %849 = vmatpush.bf16.msra.mxu0 %v400
    %850 = vmatpush.bf16.msra.mxu0 %v397
    %851 = vmatpush.bf16.msra.mxu0 %v394
    %852 = vmatpush.bf16.msra.mxu0 %v391
    %853 = vmatpush.bf16.msra.mxu0 %v388
    %854 = vmatmul.bf16.gmra.mxu0 %v718
    %v855 = vpop.f32.mrf.mxu0
    %v856 = vadd.f32 0.0, %v855
    %v857 = vpop.f32.mrf.mxu0
    %858 = vdwg.mxu0
    %v859 = vadd.f32 %v817, %v830
    %v860 = vxor.u32 %v859, 2147483648
    %v861 = vmul.f32 %v860, 1.442695
    %v862 = vpow.pop %v861
    %v863 = vadd.f32 %v862, 1.0
    %v864 = vrcp.pop %v863
    %v865 = vmul.f32 %v863, %v864
    %v866 = vsub.f32 1.0, %v865
    %v867 = vmul.f32 %v864, %v866
    %v868 = vadd.f32 %v864, %v867
    %vm869 = vweird.f32 %v863
    %vm870 = vweird.f32 %v864
    %vm871 = vmor %vm869, %vm870
    %v872 = vsel %vm871, %v864, %v868
    %v873 = vand.u32 2147483647, %v863
    %vm874 = vcmp.eq.f32.partialorder %v873, 8.507059e+37
    %v875 = vand.u32 %v863, 2147483648
    %v876 = vor.u32 1.1754944e-38, %v875
    %v877 = vsel %vm874, %v876, %v872
    %v878 = vmul.f32 1.0, %v877
    %v879 = vadd.f32 %v818, %v843
    %v880 = vxor.u32 %v879, 2147483648
    %v881 = vmul.f32 %v880, 1.442695
    %v882 = vpow.pop %v881
    %v883 = vadd.f32 %v882, 1.0
    %v884 = vrcp.pop %v883
    %v885 = vmul.f32 %v883, %v884
    %v886 = vsub.f32 1.0, %v885
    %v887 = vmul.f32 %v884, %v886
    %v888 = vadd.f32 %v884, %v887
    %vm889 = vweird.f32 %v883
    %vm890 = vweird.f32 %v884
    %vm891 = vmor %vm889, %vm890
    %v892 = vsel %vm891, %v884, %v888
    %v893 = vand.u32 2147483647, %v883
    %vm894 = vcmp.eq.f32.partialorder %v893, 8.507059e+37
    %v895 = vand.u32 %v883, 2147483648
    %v896 = vor.u32 1.1754944e-38, %v895
    %v897 = vsel %vm894, %v896, %v892
    %v898 = vmul.f32 1.0, %v897
    %v899 = vadd.f32 %v856, %v514
    %v900 = vmul.f32 %v878, %v899
    %v901 = vadd.f32 %v819, %v900
    %v902 = vtanh.pop %v901
    %v903 = vsub.f32 1.0, %v898
    %v904 = vmul.f32 %v903, %v902
    %v905 = vmul.f32 %v898, %v717
    %v906 = vadd.f32 %v904, %v905
    %v907 = vpack.c.bf16 %v906, %v906
    %v909 = vrot.slane %v907, 3
    %v912 = vsel %vm527, %v907, %v909
    %v914 = vsel %vm532, %v907, %v909
    %v916 = vrot.slane %v914, 1
    %v917 = vsel %vm536, %v907, %v909
    %v919 = vrot.slane %v917, 2
    %v920 = vsel %vm540, %v907, %v909
    %v922 = vrot.slane %v920, 3
    %v923 = vunpack.i.l.s16 %v912
    %v924 = vunpack.i.h.s16 %v912
    %v925 = vunpack.i.l.s16 %v916
    %v926 = vunpack.i.h.s16 %v916
    %v927 = vunpack.i.l.s16 %v919
    %v928 = vunpack.i.h.s16 %v919
    %v929 = vunpack.i.l.s16 %v922
    %v930 = vunpack.i.h.s16 %v922
    %v931 = vpack.i.b16 %v923, %v923
    %v932 = vpack.i.b16 %v924, %v924
    %v933 = vpack.i.b16 %v925, %v925
    %v934 = vpack.i.b16 %v926, %v926
    %v935 = vpack.i.b16 %v927, %v927
    %v936 = vpack.i.b16 %v928, %v928
    %v937 = vpack.i.b16 %v929, %v929
    %v938 = vpack.i.b16 %v930, %v930
    %v940 = vunpack.c.l.s4 286326784
    %v941 = vunpack.c.0.s8 %v940
    %v942 = vperm.slane %v931, %v941
    %v944 = vunpack.c.l.s4 286326784
    %v945 = vunpack.c.0.s8 %v944
    %v946 = vperm.slane %v932, %v945
    %v948 = vunpack.c.l.s4 286326784
    %v949 = vunpack.c.0.s8 %v948
    %v950 = vperm.slane %v933, %v949
    %v952 = vunpack.c.l.s4 286326784
    %v953 = vunpack.c.0.s8 %v952
    %v954 = vperm.slane %v934, %v953
    %v956 = vunpack.c.l.s4 286326784
    %v957 = vunpack.c.0.s8 %v956
    %v958 = vperm.slane %v935, %v957
    %v960 = vunpack.c.l.s4 286326784
    %v961 = vunpack.c.0.s8 %v960
    %v962 = vperm.slane %v936, %v961
    %v964 = vunpack.c.l.s4 286326784
    %v965 = vunpack.c.0.s8 %v964
    %v966 = vperm.slane %v937, %v965
    %v968 = vunpack.c.l.s4 286326784
    %v969 = vunpack.c.0.s8 %v968
    %v970 = vperm.slane %v938, %v969
    %vm979 = vcmask 1041409
    %vm980 = vsmask.f32 1280
    %vm981 = vmand %vm979, %vm980
    %v982 = vld [vmem:[#allocation12] sm:$0x2]
    %v983 = vsel %vm981, %v942, %v982
    %984 = vst [vmem:[#allocation12] sm:$0x2] %v983
    %v985 = vld [vmem:[#allocation12 + $0x4] sm:$0x2]
    %v986 = vsel %vm981, %v946, %v985
    %987 = vst [vmem:[#allocation12 + $0x4] sm:$0x2] %v986
    %v988 = vld [vmem:[#allocation12 + $0x8] sm:$0x2]
    %v989 = vsel %vm981, %v950, %v988
    %990 = vst [vmem:[#allocation12 + $0x8] sm:$0x2] %v989
    %v991 = vld [vmem:[#allocation12 + $0xc] sm:$0x2]
    %v992 = vsel %vm981, %v954, %v991
    %993 = vst [vmem:[#allocation12 + $0xc] sm:$0x2] %v992
    %v994 = vld [vmem:[#allocation12 + $0x10] sm:$0x2]
    %v995 = vsel %vm981, %v958, %v994
    %996 = vst [vmem:[#allocation12 + $0x10] sm:$0x2] %v995
    %v997 = vld [vmem:[#allocation12 + $0x14] sm:$0x2]
    %v998 = vsel %vm981, %v962, %v997
    %999 = vst [vmem:[#allocation12 + $0x14] sm:$0x2] %v998
    %v1000 = vld [vmem:[#allocation12 + $0x18] sm:$0x2]
    %v1001 = vsel %vm981, %v966, %v1000
    %1002 = vst [vmem:[#allocation12 + $0x18] sm:$0x2] %v1001
    %v1003 = vld [vmem:[#allocation12 + $0x1c] sm:$0x2]
    %v1004 = vsel %vm981, %v970, %v1003
    %1005 = vst [vmem:[#allocation12 + $0x1c] sm:$0x2] %v1004
    %s1006 = scalar_lea.vmem [#allocation3], 72
    %v1007 = vld [vmem:[%s1006] sm:$0xff]
    %v1008 = vld [vmem:[%s1006 + $0x8] sm:$0xff]
    %v1009 = vld [vmem:[%s1006 + $0x10] sm:$0xff]
    %1010 = vmatpush.bf16.msra.mxu0 %v407
    %1011 = vmatpush.bf16.msra.mxu0 %v404
    %1012 = vmatpush.bf16.msra.mxu0 %v401
    %1013 = vmatpush.bf16.msra.mxu0 %v398
    %1014 = vmatpush.bf16.msra.mxu0 %v395
    %1015 = vmatpush.bf16.msra.mxu0 %v392
    %1016 = vmatpush.bf16.msra.mxu0 %v389
    %1017 = vmatpush.bf16.msra.mxu0 %v386
    %1018 = vmatmul.bf16.gmra.mxu0 %v907
    %v1019 = vpop.f32.mrf.mxu0
    %v1020 = vadd.f32 0.0, %v1019
    %v1021 = vpop.f32.mrf.mxu0
    %1022 = vdwg.mxu0
    %1023 = vmatpush.bf16.msra.mxu0 %v408
    %1024 = vmatpush.bf16.msra.mxu0 %v405
    %1025 = vmatpush.bf16.msra.mxu0 %v402
    %1026 = vmatpush.bf16.msra.mxu0 %v399
    %1027 = vmatpush.bf16.msra.mxu0 %v396
    %1028 = vmatpush.bf16.msra.mxu0 %v393
    %1029 = vmatpush.bf16.msra.mxu0 %v390
    %1030 = vmatpush.bf16.msra.mxu0 %v387
    %1031 = vmatmul.bf16.gmra.mxu0 %v907
    %v1032 = vpop.f32.mrf.mxu0
    %v1033 = vadd.f32 0.0, %v1032
    %v1034 = vpop.f32.mrf.mxu0
    %1035 = vdwg.mxu0
    %1036 = vmatpush.bf16.msra.mxu0 %v409
    %1037 = vmatpush.bf16.msra.mxu0 %v406
    %1038 = vmatpush.bf16.msra.mxu0 %v403
    %1039 = vmatpush.bf16.msra.mxu0 %v400
    %1040 = vmatpush.bf16.msra.mxu0 %v397
    %1041 = vmatpush.bf16.msra.mxu0 %v394
    %1042 = vmatpush.bf16.msra.mxu0 %v391
    %1043 = vmatpush.bf16.msra.mxu0 %v388
    %1044 = vmatmul.bf16.gmra.mxu0 %v907
    %v1045 = vpop.f32.mrf.mxu0
    %v1046 = vadd.f32 0.0, %v1045
    %v1047 = vpop.f32.mrf.mxu0
    %1048 = vdwg.mxu0
    %v1049 = vadd.f32 %v1007, %v1020
    %v1050 = vxor.u32 %v1049, 2147483648
    %v1051 = vmul.f32 %v1050, 1.442695
    %v1052 = vpow.pop %v1051
    %v1053 = vadd.f32 %v1052, 1.0
    %v1054 = vrcp.pop %v1053
    %v1055 = vmul.f32 %v1053, %v1054
    %v1056 = vsub.f32 1.0, %v1055
    %v1057 = vmul.f32 %v1054, %v1056
    %v1058 = vadd.f32 %v1054, %v1057
    %vm1059 = vweird.f32 %v1053
    %vm1060 = vweird.f32 %v1054
    %vm1061 = vmor %vm1059, %vm1060
    %v1062 = vsel %vm1061, %v1054, %v1058
    %v1063 = vand.u32 2147483647, %v1053
    %vm1064 = vcmp.eq.f32.partialorder %v1063, 8.507059e+37
    %v1065 = vand.u32 %v1053, 2147483648
    %v1066 = vor.u32 1.1754944e-38, %v1065
    %v1067 = vsel %vm1064, %v1066, %v1062
    %v1068 = vmul.f32 1.0, %v1067
    %v1069 = vadd.f32 %v1008, %v1033
    %v1070 = vxor.u32 %v1069, 2147483648
    %v1071 = vmul.f32 %v1070, 1.442695
    %v1072 = vpow.pop %v1071
    %v1073 = vadd.f32 %v1072, 1.0
    %v1074 = vrcp.pop %v1073
    %v1075 = vmul.f32 %v1073, %v1074
    %v1076 = vsub.f32 1.0, %v1075
    %v1077 = vmul.f32 %v1074, %v1076
    %v1078 = vadd.f32 %v1074, %v1077
    %vm1079 = vweird.f32 %v1073
    %vm1080 = vweird.f32 %v1074
    %vm1081 = vmor %vm1079, %vm1080
    %v1082 = vsel %vm1081, %v1074, %v1078
    %v1083 = vand.u32 2147483647, %v1073
    %vm1084 = vcmp.eq.f32.partialorder %v1083, 8.507059e+37
    %v1085 = vand.u32 %v1073, 2147483648
    %v1086 = vor.u32 1.1754944e-38, %v1085
    %v1087 = vsel %vm1084, %v1086, %v1082
    %v1088 = vmul.f32 1.0, %v1087
    %v1089 = vadd.f32 %v1046, %v514
    %v1090 = vmul.f32 %v1068, %v1089
    %v1091 = vadd.f32 %v1009, %v1090
    %v1092 = vtanh.pop %v1091
    %v1093 = vsub.f32 1.0, %v1088
    %v1094 = vmul.f32 %v1093, %v1092
    %v1095 = vmul.f32 %v1088, %v906
    %v1096 = vadd.f32 %v1094, %v1095
    %v1097 = vpack.c.bf16 %v1096, %v1096
    %v1099 = vrot.slane %v1097, 3
    %v1102 = vsel %vm527, %v1097, %v1099
    %v1104 = vsel %vm532, %v1097, %v1099
    %v1106 = vrot.slane %v1104, 1
    %v1107 = vsel %vm536, %v1097, %v1099
    %v1109 = vrot.slane %v1107, 2
    %v1110 = vsel %vm540, %v1097, %v1099
    %v1112 = vrot.slane %v1110, 3
    %v1113 = vunpack.i.l.s16 %v1102
    %v1114 = vunpack.i.h.s16 %v1102
    %v1115 = vunpack.i.l.s16 %v1106
    %v1116 = vunpack.i.h.s16 %v1106
    %v1117 = vunpack.i.l.s16 %v1109
    %v1118 = vunpack.i.h.s16 %v1109
    %v1119 = vunpack.i.l.s16 %v1112
    %v1120 = vunpack.i.h.s16 %v1112
    %v1121 = vpack.i.b16 %v1113, %v1113
    %v1122 = vpack.i.b16 %v1114, %v1114
    %v1123 = vpack.i.b16 %v1115, %v1115
    %v1124 = vpack.i.b16 %v1116, %v1116
    %v1125 = vpack.i.b16 %v1117, %v1117
    %v1126 = vpack.i.b16 %v1118, %v1118
    %v1127 = vpack.i.b16 %v1119, %v1119
    %v1128 = vpack.i.b16 %v1120, %v1120
    %v1130 = vunpack.c.l.s4 286326784
    %v1131 = vunpack.c.0.s8 %v1130
    %v1132 = vperm.slane %v1121, %v1131
    %v1134 = vunpack.c.l.s4 286326784
    %v1135 = vunpack.c.0.s8 %v1134
    %v1136 = vperm.slane %v1122, %v1135
    %v1138 = vunpack.c.l.s4 286326784
    %v1139 = vunpack.c.0.s8 %v1138
    %v1140 = vperm.slane %v1123, %v1139
    %v1142 = vunpack.c.l.s4 286326784
    %v1143 = vunpack.c.0.s8 %v1142
    %v1144 = vperm.slane %v1124, %v1143
    %v1146 = vunpack.c.l.s4 286326784
    %v1147 = vunpack.c.0.s8 %v1146
    %v1148 = vperm.slane %v1125, %v1147
    %v1150 = vunpack.c.l.s4 286326784
    %v1151 = vunpack.c.0.s8 %v1150
    %v1152 = vperm.slane %v1126, %v1151
    %v1154 = vunpack.c.l.s4 286326784
    %v1155 = vunpack.c.0.s8 %v1154
    %v1156 = vperm.slane %v1127, %v1155
    %v1158 = vunpack.c.l.s4 286326784
    %v1159 = vunpack.c.0.s8 %v1158
    %v1160 = vperm.slane %v1128, %v1159
    %vm1169 = vsmask.f32 7942
    %vm1170 = vmand %vm979, %vm1169
    %v1171 = vld [vmem:[#allocation12] sm:$0x2]
    %v1172 = vsel %vm1170, %v1132, %v1171
    %1173 = vst [vmem:[#allocation12] sm:$0x2] %v1172
    %v1174 = vld [vmem:[#allocation12 + $0x4] sm:$0x2]
    %v1175 = vsel %vm1170, %v1136, %v1174
    %1176 = vst [vmem:[#allocation12 + $0x4] sm:$0x2] %v1175
    %v1177 = vld [vmem:[#allocation12 + $0x8] sm:$0x2]
    %v1178 = vsel %vm1170, %v1140, %v1177
    %1179 = vst [vmem:[#allocation12 + $0x8] sm:$0x2] %v1178
    %v1180 = vld [vmem:[#allocation12 + $0xc] sm:$0x2]
    %v1181 = vsel %vm1170, %v1144, %v1180
    %1182 = vst [vmem:[#allocation12 + $0xc] sm:$0x2] %v1181
    %v1183 = vld [vmem:[#allocation12 + $0x10] sm:$0x2]
    %v1184 = vsel %vm1170, %v1148, %v1183
    %1185 = vst [vmem:[#allocation12 + $0x10] sm:$0x2] %v1184
    %v1186 = vld [vmem:[#allocation12 + $0x14] sm:$0x2]
    %v1187 = vsel %vm1170, %v1152, %v1186
    %1188 = vst [vmem:[#allocation12 + $0x14] sm:$0x2] %v1187
    %v1189 = vld [vmem:[#allocation12 + $0x18] sm:$0x2]
    %v1190 = vsel %vm1170, %v1156, %v1189
    %1191 = vst [vmem:[#allocation12 + $0x18] sm:$0x2] %v1190
    %v1192 = vld [vmem:[#allocation12 + $0x1c] sm:$0x2]
    %v1193 = vsel %vm1170, %v1160, %v1192
    %1194 = vst [vmem:[#allocation12 + $0x1c] sm:$0x2] %v1193
    %s1195 = scalar_lea.vmem [#allocation3], 96
    %v1196 = vld [vmem:[%s1195] sm:$0xff]
    %v1197 = vld [vmem:[%s1195 + $0x8] sm:$0xff]
    %v1198 = vld [vmem:[%s1195 + $0x10] sm:$0xff]
    %1199 = vmatpush.bf16.msra.mxu0 %v407
    %1200 = vmatpush.bf16.msra.mxu0 %v404
    %1201 = vmatpush.bf16.msra.mxu0 %v401
    %1202 = vmatpush.bf16.msra.mxu0 %v398
    %1203 = vmatpush.bf16.msra.mxu0 %v395
    %1204 = vmatpush.bf16.msra.mxu0 %v392
    %1205 = vmatpush.bf16.msra.mxu0 %v389
    %1206 = vmatpush.bf16.msra.mxu0 %v386
    %1207 = vmatmul.bf16.gmra.mxu0 %v1097
    %v1208 = vpop.f32.mrf.mxu0
    %v1209 = vadd.f32 0.0, %v1208
    %v1210 = vpop.f32.mrf.mxu0
    %1211 = vdwg.mxu0
    %1212 = vmatpush.bf16.msra.mxu0 %v408
    %1213 = vmatpush.bf16.msra.mxu0 %v405
    %1214 = vmatpush.bf16.msra.mxu0 %v402
    %1215 = vmatpush.bf16.msra.mxu0 %v399
    %1216 = vmatpush.bf16.msra.mxu0 %v396
    %1217 = vmatpush.bf16.msra.mxu0 %v393
    %1218 = vmatpush.bf16.msra.mxu0 %v390
    %1219 = vmatpush.bf16.msra.mxu0 %v387
    %1220 = vmatmul.bf16.gmra.mxu0 %v1097
    %v1221 = vpop.f32.mrf.mxu0
    %v1222 = vadd.f32 0.0, %v1221
    %v1223 = vpop.f32.mrf.mxu0
    %1224 = vdwg.mxu0
    %1225 = vmatpush.bf16.msra.mxu0 %v409
    %1226 = vmatpush.bf16.msra.mxu0 %v406
    %1227 = vmatpush.bf16.msra.mxu0 %v403
    %1228 = vmatpush.bf16.msra.mxu0 %v400
    %1229 = vmatpush.bf16.msra.mxu0 %v397
    %1230 = vmatpush.bf16.msra.mxu0 %v394
    %1231 = vmatpush.bf16.msra.mxu0 %v391
    %1232 = vmatpush.bf16.msra.mxu0 %v388
    %1233 = vmatmul.bf16.gmra.mxu0 %v1097
    %v1234 = vpop.f32.mrf.mxu0
    %v1235 = vadd.f32 0.0, %v1234
    %v1236 = vpop.f32.mrf.mxu0
    %1237 = vdwg.mxu0
    %v1238 = vadd.f32 %v1196, %v1209
    %v1239 = vxor.u32 %v1238, 2147483648
    %v1240 = vmul.f32 %v1239, 1.442695
    %v1241 = vpow.pop %v1240
    %v1242 = vadd.f32 %v1241, 1.0
    %v1243 = vrcp.pop %v1242
    %v1244 = vmul.f32 %v1242, %v1243
    %v1245 = vsub.f32 1.0, %v1244
    %v1246 = vmul.f32 %v1243, %v1245
    %v1247 = vadd.f32 %v1243, %v1246
    %vm1248 = vweird.f32 %v1242
    %vm1249 = vweird.f32 %v1243
    %vm1250 = vmor %vm1248, %vm1249
    %v1251 = vsel %vm1250, %v1243, %v1247
    %v1252 = vand.u32 2147483647, %v1242
    %vm1253 = vcmp.eq.f32.partialorder %v1252, 8.507059e+37
    %v1254 = vand.u32 %v1242, 2147483648
    %v1255 = vor.u32 1.1754944e-38, %v1254
    %v1256 = vsel %vm1253, %v1255, %v1251
    %v1257 = vmul.f32 1.0, %v1256
    %v1258 = vadd.f32 %v1197, %v1222
    %v1259 = vxor.u32 %v1258, 2147483648
    %v1260 = vmul.f32 %v1259, 1.442695
    %v1261 = vpow.pop %v1260
    %v1262 = vadd.f32 %v1261, 1.0
    %v1263 = vrcp.pop %v1262
    %v1264 = vmul.f32 %v1262, %v1263
    %v1265 = vsub.f32 1.0, %v1264
    %v1266 = vmul.f32 %v1263, %v1265
    %v1267 = vadd.f32 %v1263, %v1266
    %vm1268 = vweird.f32 %v1262
    %vm1269 = vweird.f32 %v1263
    %vm1270 = vmor %vm1268, %vm1269
    %v1271 = vsel %vm1270, %v1263, %v1267
    %v1272 = vand.u32 2147483647, %v1262
    %vm1273 = vcmp.eq.f32.partialorder %v1272, 8.507059e+37
    %v1274 = vand.u32 %v1262, 2147483648
    %v1275 = vor.u32 1.1754944e-38, %v1274
    %v1276 = vsel %vm1273, %v1275, %v1271
    %v1277 = vmul.f32 1.0, %v1276
    %v1278 = vadd.f32 %v1235, %v514
    %v1279 = vmul.f32 %v1257, %v1278
    %v1280 = vadd.f32 %v1198, %v1279
    %v1281 = vtanh.pop %v1280
    %v1282 = vsub.f32 1.0, %v1277
    %v1283 = vmul.f32 %v1282, %v1281
    %v1284 = vmul.f32 %v1277, %v1096
    %v1285 = vadd.f32 %v1283, %v1284
    %v1286 = vpack.c.bf16 %v1285, %v1285
    %v1288 = vrot.slane %v1286, 3
    %v1291 = vsel %vm527, %v1286, %v1288
    %v1293 = vsel %vm532, %v1286, %v1288
    %v1295 = vrot.slane %v1293, 1
    %v1296 = vsel %vm536, %v1286, %v1288
    %v1298 = vrot.slane %v1296, 2
    %v1299 = vsel %vm540, %v1286, %v1288
    %v1301 = vrot.slane %v1299, 3
    %v1302 = vunpack.i.l.s16 %v1291
    %v1303 = vunpack.i.h.s16 %v1291
    %v1304 = vunpack.i.l.s16 %v1295
    %v1305 = vunpack.i.h.s16 %v1295
    %v1306 = vunpack.i.l.s16 %v1298
    %v1307 = vunpack.i.h.s16 %v1298
    %v1308 = vunpack.i.l.s16 %v1301
    %v1309 = vunpack.i.h.s16 %v1301
    %v1310 = vpack.i.b16 %v1302, %v1302
    %v1311 = vpack.i.b16 %v1303, %v1303
    %v1312 = vpack.i.b16 %v1304, %v1304
    %v1313 = vpack.i.b16 %v1305, %v1305
    %v1314 = vpack.i.b16 %v1306, %v1306
    %v1315 = vpack.i.b16 %v1307, %v1307
    %v1316 = vpack.i.b16 %v1308, %v1308
    %v1317 = vpack.i.b16 %v1309, %v1309
    %v1319 = vunpack.c.l.s4 286326784
    %v1320 = vunpack.c.0.s8 %v1319
    %v1321 = vperm.slane %v1310, %v1320
    %v1323 = vunpack.c.l.s4 286326784
    %v1324 = vunpack.c.0.s8 %v1323
    %v1325 = vperm.slane %v1311, %v1324
    %v1327 = vunpack.c.l.s4 286326784
    %v1328 = vunpack.c.0.s8 %v1327
    %v1329 = vperm.slane %v1312, %v1328
    %v1331 = vunpack.c.l.s4 286326784
    %v1332 = vunpack.c.0.s8 %v1331
    %v1333 = vperm.slane %v1313, %v1332
    %v1335 = vunpack.c.l.s4 286326784
    %v1336 = vunpack.c.0.s8 %v1335
    %v1337 = vperm.slane %v1314, %v1336
    %v1339 = vunpack.c.l.s4 286326784
    %v1340 = vunpack.c.0.s8 %v1339
    %v1341 = vperm.slane %v1315, %v1340
    %v1343 = vunpack.c.l.s4 286326784
    %v1344 = vunpack.c.0.s8 %v1343
    %v1345 = vperm.slane %v1316, %v1344
    %v1347 = vunpack.c.l.s4 286326784
    %v1348 = vunpack.c.0.s8 %v1347
    %v1349 = vperm.slane %v1317, %v1348
    %vm1358 = vcmask 1042434
    %vm1359 = vsmask.f32 2304
    %vm1360 = vmand %vm1358, %vm1359
    %v1361 = vld [vmem:[#allocation12] sm:$0x4]
    %v1362 = vsel %vm1360, %v1321, %v1361
    %1363 = vst [vmem:[#allocation12] sm:$0x4] %v1362
    %v1364 = vld [vmem:[#allocation12 + $0x4] sm:$0x4]
    %v1365 = vsel %vm1360, %v1325, %v1364
    %1366 = vst [vmem:[#allocation12 + $0x4] sm:$0x4] %v1365
    %v1367 = vld [vmem:[#allocation12 + $0x8] sm:$0x4]
    %v1368 = vsel %vm1360, %v1329, %v1367
    %1369 = vst [vmem:[#allocation12 + $0x8] sm:$0x4] %v1368
    %v1370 = vld [vmem:[#allocation12 + $0xc] sm:$0x4]
    %v1371 = vsel %vm1360, %v1333, %v1370
    %1372 = vst [vmem:[#allocation12 + $0xc] sm:$0x4] %v1371
    %v1373 = vld [vmem:[#allocation12 + $0x10] sm:$0x4]
    %v1374 = vsel %vm1360, %v1337, %v1373
    %1375 = vst [vmem:[#allocation12 + $0x10] sm:$0x4] %v1374
    %v1376 = vld [vmem:[#allocation12 + $0x14] sm:$0x4]
    %v1377 = vsel %vm1360, %v1341, %v1376
    %1378 = vst [vmem:[#allocation12 + $0x14] sm:$0x4] %v1377
    %v1379 = vld [vmem:[#allocation12 + $0x18] sm:$0x4]
    %v1380 = vsel %vm1360, %v1345, %v1379
    %1381 = vst [vmem:[#allocation12 + $0x18] sm:$0x4] %v1380
    %v1382 = vld [vmem:[#allocation12 + $0x1c] sm:$0x4]
    %v1383 = vsel %vm1360, %v1349, %v1382
    %1384 = vst [vmem:[#allocation12 + $0x1c] sm:$0x4] %v1383
    %s1385 = scalar_lea.vmem [#allocation3], 120
    %v1386 = vld [vmem:[%s1385] sm:$0xff]
    %v1387 = vld [vmem:[%s1385 + $0x8] sm:$0xff]
    %v1388 = vld [vmem:[%s1385 + $0x10] sm:$0xff]
    %1389 = vmatpush.bf16.msra.mxu0 %v407
    %1390 = vmatpush.bf16.msra.mxu0 %v404
    %1391 = vmatpush.bf16.msra.mxu0 %v401
    %1392 = vmatpush.bf16.msra.mxu0 %v398
    %1393 = vmatpush.bf16.msra.mxu0 %v395
    %1394 = vmatpush.bf16.msra.mxu0 %v392
    %1395 = vmatpush.bf16.msra.mxu0 %v389
    %1396 = vmatpush.bf16.msra.mxu0 %v386
    %1397 = vmatmul.bf16.gmra.mxu0 %v1286
    %v1398 = vpop.f32.mrf.mxu0
    %v1399 = vadd.f32 0.0, %v1398
    %v1400 = vpop.f32.mrf.mxu0
    %1401 = vdwg.mxu0
    %1402 = vmatpush.bf16.msra.mxu0 %v408
    %1403 = vmatpush.bf16.msra.mxu0 %v405
    %1404 = vmatpush.bf16.msra.mxu0 %v402
    %1405 = vmatpush.bf16.msra.mxu0 %v399
    %1406 = vmatpush.bf16.msra.mxu0 %v396
    %1407 = vmatpush.bf16.msra.mxu0 %v393
    %1408 = vmatpush.bf16.msra.mxu0 %v390
    %1409 = vmatpush.bf16.msra.mxu0 %v387
    %1410 = vmatmul.bf16.gmra.mxu0 %v1286
    %v1411 = vpop.f32.mrf.mxu0
    %v1412 = vadd.f32 0.0, %v1411
    %v1413 = vpop.f32.mrf.mxu0
    %1414 = vdwg.mxu0
    %1415 = vmatpush.bf16.msra.mxu0 %v409
    %1416 = vmatpush.bf16.msra.mxu0 %v406
    %1417 = vmatpush.bf16.msra.mxu0 %v403
    %1418 = vmatpush.bf16.msra.mxu0 %v400
    %1419 = vmatpush.bf16.msra.mxu0 %v397
    %1420 = vmatpush.bf16.msra.mxu0 %v394
    %1421 = vmatpush.bf16.msra.mxu0 %v391
    %1422 = vmatpush.bf16.msra.mxu0 %v388
    %1423 = vmatmul.bf16.gmra.mxu0 %v1286
    %v1424 = vpop.f32.mrf.mxu0
    %v1425 = vadd.f32 0.0, %v1424
    %v1426 = vpop.f32.mrf.mxu0
    %1427 = vdwg.mxu0
    %v1428 = vadd.f32 %v1386, %v1399
    %v1429 = vxor.u32 %v1428, 2147483648
    %v1430 = vmul.f32 %v1429, 1.442695
    %v1431 = vpow.pop %v1430
    %v1432 = vadd.f32 %v1431, 1.0
    %v1433 = vrcp.pop %v1432
    %v1434 = vmul.f32 %v1432, %v1433
    %v1435 = vsub.f32 1.0, %v1434
    %v1436 = vmul.f32 %v1433, %v1435
    %v1437 = vadd.f32 %v1433, %v1436
    %vm1438 = vweird.f32 %v1432
    %vm1439 = vweird.f32 %v1433
    %vm1440 = vmor %vm1438, %vm1439
    %v1441 = vsel %vm1440, %v1433, %v1437
    %v1442 = vand.u32 2147483647, %v1432
    %vm1443 = vcmp.eq.f32.partialorder %v1442, 8.507059e+37
    %v1444 = vand.u32 %v1432, 2147483648
    %v1445 = vor.u32 1.1754944e-38, %v1444
    %v1446 = vsel %vm1443, %v1445, %v1441
    %v1447 = vmul.f32 1.0, %v1446
    %v1448 = vadd.f32 %v1387, %v1412
    %v1449 = vxor.u32 %v1448, 2147483648
    %v1450 = vmul.f32 %v1449, 1.442695
    %v1451 = vpow.pop %v1450
    %v1452 = vadd.f32 %v1451, 1.0
    %v1453 = vrcp.pop %v1452
    %v1454 = vmul.f32 %v1452, %v1453
    %v1455 = vsub.f32 1.0, %v1454
    %v1456 = vmul.f32 %v1453, %v1455
    %v1457 = vadd.f32 %v1453, %v1456
    %vm1458 = vweird.f32 %v1452
    %vm1459 = vweird.f32 %v1453
    %vm1460 = vmor %vm1458, %vm1459
    %v1461 = vsel %vm1460, %v1453, %v1457
    %v1462 = vand.u32 2147483647, %v1452
    %vm1463 = vcmp.eq.f32.partialorder %v1462, 8.507059e+37
    %v1464 = vand.u32 %v1452, 2147483648
    %v1465 = vor.u32 1.1754944e-38, %v1464
    %v1466 = vsel %vm1463, %v1465, %v1461
    %v1467 = vmul.f32 1.0, %v1466
    %v1468 = vadd.f32 %v1425, %v514
    %v1469 = vmul.f32 %v1447, %v1468
    %v1470 = vadd.f32 %v1388, %v1469
    %v1471 = vtanh.pop %v1470
    %v1472 = vsub.f32 1.0, %v1467
    %v1473 = vmul.f32 %v1472, %v1471
    %v1474 = vmul.f32 %v1467, %v1285
    %v1475 = vadd.f32 %v1473, %v1474
    %v1476 = vpack.c.bf16 %v1475, %v1475
    %v1478 = vrot.slane %v1476, 3
    %v1481 = vsel %vm527, %v1476, %v1478
    %v1483 = vsel %vm532, %v1476, %v1478
    %v1485 = vrot.slane %v1483, 1
    %v1486 = vsel %vm536, %v1476, %v1478
    %v1488 = vrot.slane %v1486, 2
    %v1489 = vsel %vm540, %v1476, %v1478
    %v1491 = vrot.slane %v1489, 3
    %v1492 = vunpack.i.l.s16 %v1481
    %v1493 = vunpack.i.h.s16 %v1481
    %v1494 = vunpack.i.l.s16 %v1485
    %v1495 = vunpack.i.h.s16 %v1485
    %v1496 = vunpack.i.l.s16 %v1488
    %v1497 = vunpack.i.h.s16 %v1488
    %v1498 = vunpack.i.l.s16 %v1491
    %v1499 = vunpack.i.h.s16 %v1491
    %v1500 = vpack.i.b16 %v1492, %v1492
    %v1501 = vpack.i.b16 %v1493, %v1493
    %v1502 = vpack.i.b16 %v1494, %v1494
    %v1503 = vpack.i.b16 %v1495, %v1495
    %v1504 = vpack.i.b16 %v1496, %v1496
    %v1505 = vpack.i.b16 %v1497, %v1497
    %v1506 = vpack.i.b16 %v1498, %v1498
    %v1507 = vpack.i.b16 %v1499, %v1499
    %v1509 = vunpack.c.l.s4 286326784
    %v1510 = vunpack.c.0.s8 %v1509
    %v1511 = vperm.slane %v1500, %v1510
    %v1513 = vunpack.c.l.s4 286326784
    %v1514 = vunpack.c.0.s8 %v1513
    %v1515 = vperm.slane %v1501, %v1514
    %v1517 = vunpack.c.l.s4 286326784
    %v1518 = vunpack.c.0.s8 %v1517
    %v1519 = vperm.slane %v1502, %v1518
    %v1521 = vunpack.c.l.s4 286326784
    %v1522 = vunpack.c.0.s8 %v1521
    %v1523 = vperm.slane %v1503, %v1522
    %v1525 = vunpack.c.l.s4 286326784
    %v1526 = vunpack.c.0.s8 %v1525
    %v1527 = vperm.slane %v1504, %v1526
    %v1529 = vunpack.c.l.s4 286326784
    %v1530 = vunpack.c.0.s8 %v1529
    %v1531 = vperm.slane %v1505, %v1530
    %v1533 = vunpack.c.l.s4 286326784
    %v1534 = vunpack.c.0.s8 %v1533
    %v1535 = vperm.slane %v1506, %v1534
    %v1537 = vunpack.c.l.s4 286326784
    %v1538 = vunpack.c.0.s8 %v1537
    %v1539 = vperm.slane %v1507, %v1538
    %vm1548 = vsmask.f32 7946
    %vm1549 = vmand %vm1358, %vm1548
    %v1550 = vld [vmem:[#allocation12] sm:$0x4]
    %v1551 = vsel %vm1549, %v1511, %v1550
    %1552 = vst [vmem:[#allocation12] sm:$0x4] %v1551
    %v1553 = vld [vmem:[#allocation12 + $0x4] sm:$0x4]
    %v1554 = vsel %vm1549, %v1515, %v1553
    %1555 = vst [vmem:[#allocation12 + $0x4] sm:$0x4] %v1554
    %v1556 = vld [vmem:[#allocation12 + $0x8] sm:$0x4]
    %v1557 = vsel %vm1549, %v1519, %v1556
    %1558 = vst [vmem:[#allocation12 + $0x8] sm:$0x4] %v1557
    %v1559 = vld [vmem:[#allocation12 + $0xc] sm:$0x4]
    %v1560 = vsel %vm1549, %v1523, %v1559
    %1561 = vst [vmem:[#allocation12 + $0xc] sm:$0x4] %v1560
    %v1562 = vld [vmem:[#allocation12 + $0x10] sm:$0x4]
    %v1563 = vsel %vm1549, %v1527, %v1562
    %1564 = vst [vmem:[#allocation12 + $0x10] sm:$0x4] %v1563
    %v1565 = vld [vmem:[#allocation12 + $0x14] sm:$0x4]
    %v1566 = vsel %vm1549, %v1531, %v1565
    %1567 = vst [vmem:[#allocation12 + $0x14] sm:$0x4] %v1566
    %v1568 = vld [vmem:[#allocation12 + $0x18] sm:$0x4]
    %v1569 = vsel %vm1549, %v1535, %v1568
    %1570 = vst [vmem:[#allocation12 + $0x18] sm:$0x4] %v1569
    %v1571 = vld [vmem:[#allocation12 + $0x1c] sm:$0x4]
    %v1572 = vsel %vm1549, %v1539, %v1571
    %1573 = vst [vmem:[#allocation12 + $0x1c] sm:$0x4] %v1572
    %s1574 = scalar_lea.vmem [#allocation3], 144
    %v1575 = vld [vmem:[%s1574] sm:$0xff]
    %v1576 = vld [vmem:[%s1574 + $0x8] sm:$0xff]
    %v1577 = vld [vmem:[%s1574 + $0x10] sm:$0xff]
    %1578 = vmatpush.bf16.msra.mxu0 %v407
    %1579 = vmatpush.bf16.msra.mxu0 %v404
    %1580 = vmatpush.bf16.msra.mxu0 %v401
    %1581 = vmatpush.bf16.msra.mxu0 %v398
    %1582 = vmatpush.bf16.msra.mxu0 %v395
    %1583 = vmatpush.bf16.msra.mxu0 %v392
    %1584 = vmatpush.bf16.msra.mxu0 %v389
    %1585 = vmatpush.bf16.msra.mxu0 %v386
    %1586 = vmatmul.bf16.gmra.mxu0 %v1476
    %v1587 = vpop.f32.mrf.mxu0
    %v1588 = vadd.f32 0.0, %v1587
    %v1589 = vpop.f32.mrf.mxu0
    %1590 = vdwg.mxu0
    %1591 = vmatpush.bf16.msra.mxu0 %v408
    %1592 = vmatpush.bf16.msra.mxu0 %v405
    %1593 = vmatpush.bf16.msra.mxu0 %v402
    %1594 = vmatpush.bf16.msra.mxu0 %v399
    %1595 = vmatpush.bf16.msra.mxu0 %v396
    %1596 = vmatpush.bf16.msra.mxu0 %v393
    %1597 = vmatpush.bf16.msra.mxu0 %v390
    %1598 = vmatpush.bf16.msra.mxu0 %v387
    %1599 = vmatmul.bf16.gmra.mxu0 %v1476
    %v1600 = vpop.f32.mrf.mxu0
    %v1601 = vadd.f32 0.0, %v1600
    %v1602 = vpop.f32.mrf.mxu0
    %1603 = vdwg.mxu0
    %1604 = vmatpush.bf16.msra.mxu0 %v409
    %1605 = vmatpush.bf16.msra.mxu0 %v406
    %1606 = vmatpush.bf16.msra.mxu0 %v403
    %1607 = vmatpush.bf16.msra.mxu0 %v400
    %1608 = vmatpush.bf16.msra.mxu0 %v397
    %1609 = vmatpush.bf16.msra.mxu0 %v394
    %1610 = vmatpush.bf16.msra.mxu0 %v391
    %1611 = vmatpush.bf16.msra.mxu0 %v388
    %1612 = vmatmul.bf16.gmra.mxu0 %v1476
    %v1613 = vpop.f32.mrf.mxu0
    %v1614 = vadd.f32 0.0, %v1613
    %v1615 = vpop.f32.mrf.mxu0
    %1616 = vdwg.mxu0
    %v1617 = vadd.f32 %v1575, %v1588
    %v1618 = vxor.u32 %v1617, 2147483648
    %v1619 = vmul.f32 %v1618, 1.442695
    %v1620 = vpow.pop %v1619
    %v1621 = vadd.f32 %v1620, 1.0
    %v1622 = vrcp.pop %v1621
    %v1623 = vmul.f32 %v1621, %v1622
    %v1624 = vsub.f32 1.0, %v1623
    %v1625 = vmul.f32 %v1622, %v1624
    %v1626 = vadd.f32 %v1622, %v1625
    %vm1627 = vweird.f32 %v1621
    %vm1628 = vweird.f32 %v1622
    %vm1629 = vmor %vm1627, %vm1628
    %v1630 = vsel %vm1629, %v1622, %v1626
    %v1631 = vand.u32 2147483647, %v1621
    %vm1632 = vcmp.eq.f32.partialorder %v1631, 8.507059e+37
    %v1633 = vand.u32 %v1621, 2147483648
    %v1634 = vor.u32 1.1754944e-38, %v1633
    %v1635 = vsel %vm1632, %v1634, %v1630
    %v1636 = vmul.f32 1.0, %v1635
    %v1637 = vadd.f32 %v1576, %v1601
    %v1638 = vxor.u32 %v1637, 2147483648
    %v1639 = vmul.f32 %v1638, 1.442695
    %v1640 = vpow.pop %v1639
    %v1641 = vadd.f32 %v1640, 1.0
    %v1642 = vrcp.pop %v1641
    %v1643 = vmul.f32 %v1641, %v1642
    %v1644 = vsub.f32 1.0, %v1643
    %v1645 = vmul.f32 %v1642, %v1644
    %v1646 = vadd.f32 %v1642, %v1645
    %vm1647 = vweird.f32 %v1641
    %vm1648 = vweird.f32 %v1642
    %vm1649 = vmor %vm1647, %vm1648
    %v1650 = vsel %vm1649, %v1642, %v1646
    %v1651 = vand.u32 2147483647, %v1641
    %vm1652 = vcmp.eq.f32.partialorder %v1651, 8.507059e+37
    %v1653 = vand.u32 %v1641, 2147483648
    %v1654 = vor.u32 1.1754944e-38, %v1653
    %v1655 = vsel %vm1652, %v1654, %v1650
    %v1656 = vmul.f32 1.0, %v1655
    %v1657 = vadd.f32 %v1614, %v514
    %v1658 = vmul.f32 %v1636, %v1657
    %v1659 = vadd.f32 %v1577, %v1658
    %v1660 = vtanh.pop %v1659
    %v1661 = vsub.f32 1.0, %v1656
    %v1662 = vmul.f32 %v1661, %v1660
    %v1663 = vmul.f32 %v1656, %v1475
    %v1664 = vadd.f32 %v1662, %v1663
    %v1665 = vpack.c.bf16 %v1664, %v1664
    %v1667 = vrot.slane %v1665, 3
    %v1670 = vsel %vm527, %v1665, %v1667
    %v1672 = vsel %vm532, %v1665, %v1667
    %v1674 = vrot.slane %v1672, 1
    %v1675 = vsel %vm536, %v1665, %v1667
    %v1677 = vrot.slane %v1675, 2
    %v1678 = vsel %vm540, %v1665, %v1667
    %v1680 = vrot.slane %v1678, 3
    %v1681 = vunpack.i.l.s16 %v1670
    %v1682 = vunpack.i.h.s16 %v1670
    %v1683 = vunpack.i.l.s16 %v1674
    %v1684 = vunpack.i.h.s16 %v1674
    %v1685 = vunpack.i.l.s16 %v1677
    %v1686 = vunpack.i.h.s16 %v1677
    %v1687 = vunpack.i.l.s16 %v1680
    %v1688 = vunpack.i.h.s16 %v1680
    %v1689 = vpack.i.b16 %v1681, %v1681
    %v1690 = vpack.i.b16 %v1682, %v1682
    %v1691 = vpack.i.b16 %v1683, %v1683
    %v1692 = vpack.i.b16 %v1684, %v1684
    %v1693 = vpack.i.b16 %v1685, %v1685
    %v1694 = vpack.i.b16 %v1686, %v1686
    %v1695 = vpack.i.b16 %v1687, %v1687
    %v1696 = vpack.i.b16 %v1688, %v1688
    %v1698 = vunpack.c.l.s4 286326784
    %v1699 = vunpack.c.0.s8 %v1698
    %v1700 = vperm.slane %v1689, %v1699
    %v1702 = vunpack.c.l.s4 286326784
    %v1703 = vunpack.c.0.s8 %v1702
    %v1704 = vperm.slane %v1690, %v1703
    %v1706 = vunpack.c.l.s4 286326784
    %v1707 = vunpack.c.0.s8 %v1706
    %v1708 = vperm.slane %v1691, %v1707
    %v1710 = vunpack.c.l.s4 286326784
    %v1711 = vunpack.c.0.s8 %v1710
    %v1712 = vperm.slane %v1692, %v1711
    %v1714 = vunpack.c.l.s4 286326784
    %v1715 = vunpack.c.0.s8 %v1714
    %v1716 = vperm.slane %v1693, %v1715
    %v1718 = vunpack.c.l.s4 286326784
    %v1719 = vunpack.c.0.s8 %v1718
    %v1720 = vperm.slane %v1694, %v1719
    %v1722 = vunpack.c.l.s4 286326784
    %v1723 = vunpack.c.0.s8 %v1722
    %v1724 = vperm.slane %v1695, %v1723
    %v1726 = vunpack.c.l.s4 286326784
    %v1727 = vunpack.c.0.s8 %v1726
    %v1728 = vperm.slane %v1696, %v1727
    %vm1737 = vcmask 1043459
    %vm1738 = vsmask.f32 3328
    %vm1739 = vmand %vm1737, %vm1738
    %v1740 = vld [vmem:[#allocation12] sm:$0x8]
    %v1741 = vsel %vm1739, %v1700, %v1740
    %1742 = vst [vmem:[#allocation12] sm:$0x8] %v1741
    %v1743 = vld [vmem:[#allocation12 + $0x4] sm:$0x8]
    %v1744 = vsel %vm1739, %v1704, %v1743
    %1745 = vst [vmem:[#allocation12 + $0x4] sm:$0x8] %v1744
    %v1746 = vld [vmem:[#allocation12 + $0x8] sm:$0x8]
    %v1747 = vsel %vm1739, %v1708, %v1746
    %1748 = vst [vmem:[#allocation12 + $0x8] sm:$0x8] %v1747
    %v1749 = vld [vmem:[#allocation12 + $0xc] sm:$0x8]
    %v1750 = vsel %vm1739, %v1712, %v1749
    %1751 = vst [vmem:[#allocation12 + $0xc] sm:$0x8] %v1750
    %v1752 = vld [vmem:[#allocation12 + $0x10] sm:$0x8]
    %v1753 = vsel %vm1739, %v1716, %v1752
    %1754 = vst [vmem:[#allocation12 + $0x10] sm:$0x8] %v1753
    %v1755 = vld [vmem:[#allocation12 + $0x14] sm:$0x8]
    %v1756 = vsel %vm1739, %v1720, %v1755
    %1757 = vst [vmem:[#allocation12 + $0x14] sm:$0x8] %v1756
    %v1758 = vld [vmem:[#allocation12 + $0x18] sm:$0x8]
    %v1759 = vsel %vm1739, %v1724, %v1758
    %1760 = vst [vmem:[#allocation12 + $0x18] sm:$0x8] %v1759
    %v1761 = vld [vmem:[#allocation12 + $0x1c] sm:$0x8]
    %v1762 = vsel %vm1739, %v1728, %v1761
    %1763 = vst [vmem:[#allocation12 + $0x1c] sm:$0x8] %v1762
    %s1764 = scalar_lea.vmem [#allocation3], 168
    %v1765 = vld [vmem:[%s1764] sm:$0xff]
    %v1766 = vld [vmem:[%s1764 + $0x8] sm:$0xff]
    %v1767 = vld [vmem:[%s1764 + $0x10] sm:$0xff]
    %1768 = vmatpush.bf16.msra.mxu0 %v407
    %1769 = vmatpush.bf16.msra.mxu0 %v404
    %1770 = vmatpush.bf16.msra.mxu0 %v401
    %1771 = vmatpush.bf16.msra.mxu0 %v398
    %1772 = vmatpush.bf16.msra.mxu0 %v395
    %1773 = vmatpush.bf16.msra.mxu0 %v392
    %1774 = vmatpush.bf16.msra.mxu0 %v389
    %1775 = vmatpush.bf16.msra.mxu0 %v386
    %1776 = vmatmul.bf16.gmra.mxu0 %v1665
    %v1777 = vpop.f32.mrf.mxu0
    %v1778 = vadd.f32 0.0, %v1777
    %v1779 = vpop.f32.mrf.mxu0
    %1780 = vdwg.mxu0
    %1781 = vmatpush.bf16.msra.mxu0 %v408
    %1782 = vmatpush.bf16.msra.mxu0 %v405
    %1783 = vmatpush.bf16.msra.mxu0 %v402
    %1784 = vmatpush.bf16.msra.mxu0 %v399
    %1785 = vmatpush.bf16.msra.mxu0 %v396
    %1786 = vmatpush.bf16.msra.mxu0 %v393
    %1787 = vmatpush.bf16.msra.mxu0 %v390
    %1788 = vmatpush.bf16.msra.mxu0 %v387
    %1789 = vmatmul.bf16.gmra.mxu0 %v1665
    %v1790 = vpop.f32.mrf.mxu0
    %v1791 = vadd.f32 0.0, %v1790
    %v1792 = vpop.f32.mrf.mxu0
    %1793 = vdwg.mxu0
    %1794 = vmatpush.bf16.msra.mxu0 %v409
    %1795 = vmatpush.bf16.msra.mxu0 %v406
    %1796 = vmatpush.bf16.msra.mxu0 %v403
    %1797 = vmatpush.bf16.msra.mxu0 %v400
    %1798 = vmatpush.bf16.msra.mxu0 %v397
    %1799 = vmatpush.bf16.msra.mxu0 %v394
    %1800 = vmatpush.bf16.msra.mxu0 %v391
    %1801 = vmatpush.bf16.msra.mxu0 %v388
    %1802 = vmatmul.bf16.gmra.mxu0 %v1665
    %v1803 = vpop.f32.mrf.mxu0
    %v1804 = vadd.f32 0.0, %v1803
    %v1805 = vpop.f32.mrf.mxu0
    %1806 = vdwg.mxu0
    %v1807 = vadd.f32 %v1765, %v1778
    %v1808 = vxor.u32 %v1807, 2147483648
    %v1809 = vmul.f32 %v1808, 1.442695
    %v1810 = vpow.pop %v1809
    %v1811 = vadd.f32 %v1810, 1.0
    %v1812 = vrcp.pop %v1811
    %v1813 = vmul.f32 %v1811, %v1812
    %v1814 = vsub.f32 1.0, %v1813
    %v1815 = vmul.f32 %v1812, %v1814
    %v1816 = vadd.f32 %v1812, %v1815
    %vm1817 = vweird.f32 %v1811
    %vm1818 = vweird.f32 %v1812
    %vm1819 = vmor %vm1817, %vm1818
    %v1820 = vsel %vm1819, %v1812, %v1816
    %v1821 = vand.u32 2147483647, %v1811
    %vm1822 = vcmp.eq.f32.partialorder %v1821, 8.507059e+37
    %v1823 = vand.u32 %v1811, 2147483648
    %v1824 = vor.u32 1.1754944e-38, %v1823
    %v1825 = vsel %vm1822, %v1824, %v1820
    %v1826 = vmul.f32 1.0, %v1825
    %v1827 = vadd.f32 %v1766, %v1791
    %v1828 = vxor.u32 %v1827, 2147483648
    %v1829 = vmul.f32 %v1828, 1.442695
    %v1830 = vpow.pop %v1829
    %v1831 = vadd.f32 %v1830, 1.0
    %v1832 = vrcp.pop %v1831
    %v1833 = vmul.f32 %v1831, %v1832
    %v1834 = vsub.f32 1.0, %v1833
    %v1835 = vmul.f32 %v1832, %v1834
    %v1836 = vadd.f32 %v1832, %v1835
    %vm1837 = vweird.f32 %v1831
    %vm1838 = vweird.f32 %v1832
    %vm1839 = vmor %vm1837, %vm1838
    %v1840 = vsel %vm1839, %v1832, %v1836
    %v1841 = vand.u32 2147483647, %v1831
    %vm1842 = vcmp.eq.f32.partialorder %v1841, 8.507059e+37
    %v1843 = vand.u32 %v1831, 2147483648
    %v1844 = vor.u32 1.1754944e-38, %v1843
    %v1845 = vsel %vm1842, %v1844, %v1840
    %v1846 = vmul.f32 1.0, %v1845
    %v1847 = vadd.f32 %v1804, %v514
    %v1848 = vmul.f32 %v1826, %v1847
    %v1849 = vadd.f32 %v1767, %v1848
    %v1850 = vtanh.pop %v1849
    %v1851 = vsub.f32 1.0, %v1846
    %v1852 = vmul.f32 %v1851, %v1850
    %v1853 = vmul.f32 %v1846, %v1664
    %v1854 = vadd.f32 %v1852, %v1853
    %v1855 = vpack.c.bf16 %v1854, %v1854
    %v1857 = vrot.slane %v1855, 3
    %v1860 = vsel %vm527, %v1855, %v1857
    %v1862 = vsel %vm532, %v1855, %v1857
    %v1864 = vrot.slane %v1862, 1
    %v1865 = vsel %vm536, %v1855, %v1857
    %v1867 = vrot.slane %v1865, 2
    %v1868 = vsel %vm540, %v1855, %v1857
    %v1870 = vrot.slane %v1868, 3
    %v1871 = vunpack.i.l.s16 %v1860
    %v1872 = vunpack.i.h.s16 %v1860
    %v1873 = vunpack.i.l.s16 %v1864
    %v1874 = vunpack.i.h.s16 %v1864
    %v1875 = vunpack.i.l.s16 %v1867
    %v1876 = vunpack.i.h.s16 %v1867
    %v1877 = vunpack.i.l.s16 %v1870
    %v1878 = vunpack.i.h.s16 %v1870
    %v1879 = vpack.i.b16 %v1871, %v1871
    %v1880 = vpack.i.b16 %v1872, %v1872
    %v1881 = vpack.i.b16 %v1873, %v1873
    %v1882 = vpack.i.b16 %v1874, %v1874
    %v1883 = vpack.i.b16 %v1875, %v1875
    %v1884 = vpack.i.b16 %v1876, %v1876
    %v1885 = vpack.i.b16 %v1877, %v1877
    %v1886 = vpack.i.b16 %v1878, %v1878
    %v1888 = vunpack.c.l.s4 286326784
    %v1889 = vunpack.c.0.s8 %v1888
    %v1890 = vperm.slane %v1879, %v1889
    %v1892 = vunpack.c.l.s4 286326784
    %v1893 = vunpack.c.0.s8 %v1892
    %v1894 = vperm.slane %v1880, %v1893
    %v1896 = vunpack.c.l.s4 286326784
    %v1897 = vunpack.c.0.s8 %v1896
    %v1898 = vperm.slane %v1881, %v1897
    %v1900 = vunpack.c.l.s4 286326784
    %v1901 = vunpack.c.0.s8 %v1900
    %v1902 = vperm.slane %v1882, %v1901
    %v1904 = vunpack.c.l.s4 286326784
    %v1905 = vunpack.c.0.s8 %v1904
    %v1906 = vperm.slane %v1883, %v1905
    %v1908 = vunpack.c.l.s4 286326784
    %v1909 = vunpack.c.0.s8 %v1908
    %v1910 = vperm.slane %v1884, %v1909
    %v1912 = vunpack.c.l.s4 286326784
    %v1913 = vunpack.c.0.s8 %v1912
    %v1914 = vperm.slane %v1885, %v1913
    %v1916 = vunpack.c.l.s4 286326784
    %v1917 = vunpack.c.0.s8 %v1916
    %v1918 = vperm.slane %v1886, %v1917
    %vm1927 = vsmask.f32 7950
    %vm1928 = vmand %vm1737, %vm1927
    %v1929 = vld [vmem:[#allocation12] sm:$0x8]
    %v1930 = vsel %vm1928, %v1890, %v1929
    %1931 = vst [vmem:[#allocation12] sm:$0x8] %v1930
    %v1932 = vld [vmem:[#allocation12 + $0x4] sm:$0x8]
    %v1933 = vsel %vm1928, %v1894, %v1932
    %1934 = vst [vmem:[#allocation12 + $0x4] sm:$0x8] %v1933
    %v1935 = vld [vmem:[#allocation12 + $0x8] sm:$0x8]
    %v1936 = vsel %vm1928, %v1898, %v1935
    %1937 = vst [vmem:[#allocation12 + $0x8] sm:$0x8] %v1936
    %v1938 = vld [vmem:[#allocation12 + $0xc] sm:$0x8]
    %v1939 = vsel %vm1928, %v1902, %v1938
    %1940 = vst [vmem:[#allocation12 + $0xc] sm:$0x8] %v1939
    %v1941 = vld [vmem:[#allocation12 + $0x10] sm:$0x8]
    %v1942 = vsel %vm1928, %v1906, %v1941
    %1943 = vst [vmem:[#allocation12 + $0x10] sm:$0x8] %v1942
    %v1944 = vld [vmem:[#allocation12 + $0x14] sm:$0x8]
    %v1945 = vsel %vm1928, %v1910, %v1944
    %1946 = vst [vmem:[#allocation12 + $0x14] sm:$0x8] %v1945
    %v1947 = vld [vmem:[#allocation12 + $0x18] sm:$0x8]
    %v1948 = vsel %vm1928, %v1914, %v1947
    %1949 = vst [vmem:[#allocation12 + $0x18] sm:$0x8] %v1948
    %v1950 = vld [vmem:[#allocation12 + $0x1c] sm:$0x8]
    %v1951 = vsel %vm1928, %v1918, %v1950
    %1952 = vst [vmem:[#allocation12 + $0x1c] sm:$0x8] %v1951
    %1953 = vst [vmem:[#allocation2] sm:$0xff] %v1854
    // Predicated region
    $region42: #{tpu_custom_call.1} parent=1 // pred_check
      _
    $region43: #{tpu_custom_call.1} parent=1 // pred_check_branch
      %1955 = sbr.rel (0) target = $region45
    $region44: #{tpu_custom_call.1} parent=1 // pred_region
      %1957 = vsyncadd [#allocation6], 0
      %s1958 = sshll.u32 [#allocation12], 4
      %s1959 = int_to_ptr.vmem [resolvable:$true] %s1958
      %s1960 = sshll.u32 %s5, 4
      %s1961 = int_to_ptr.hbm [resolvable:$true] %s1960
      %1966 = dma.vmem_to_hbm [thread:$0]  %s1959, 512, %s1961, [#allocation6], 64, 64, 4
    $region45: #{tpu_custom_call.1} parent=1 // pred_fallthru
      _
    // Predicated region
    $region46: #{tpu_custom_call.1} parent=1 // pred_check
      _
    $region47: #{tpu_custom_call.1} parent=1 // pred_check_branch
      %1968 = sbr.rel (0) target = $region49
    $region48: #{tpu_custom_call.1} parent=1 // pred_region
      %1970 = dma.done [#allocation6], 512
    $region49: #{tpu_custom_call.1} parent=1 // pred_fallthru
      _
    %1971 = vsyncpa [#allocation5], 1
    %1972 = vsyncpa [#allocation8], 1
    %1973 = vsyncpa [#allocation11], 1
    %1974 = vsyncpa [#allocation6], 1

</llo_original>
